<compile_context>
chip_gen: v7x
topology: tpu7x:2x2x1
jax: 0.10.0
libtpu: 0.0.40
codegen_flags: <defaults>
</compile_context>

<pallas_src>
import jax
import jax.numpy as jnp
from jax.experimental import pallas as pl
from jax.experimental.pallas import tpu as pltpu

# ----- "env_params" (small, synthetic) --------------------------------------
OBS_DIM = 24
GOAL_DIM = 8
IN_DIM = OBS_DIM + GOAL_DIM          # 32
HIDDEN = 256
ACTION_DIM = 4
XN_DIM = IN_DIM + ACTION_DIM         # 36 : [x | noise] packed input
OUT_LANES = 128                      # lane-dense packed output row
MAX_ACTION = 2.0
MIN_LOG_STD = -30.0                  # clamp(tanh(x), -30, 30) is a no-op; kept for the reference only
MAX_LOG_STD = 30.0
BATCH = 128


def _num_grid_tiles():
    """1 grid step on single-TensorCore chips (v5e/v6e); 2 on v7x (2 TCs)."""
    try:
        kind = jax.devices()[0].device_kind.lower()
    except Exception:
        return 1
    return 2 if "v7" in kind else 1


def _actor_kernel(xn_ref, w1_ref, w23_ref, b_ref, wh_ref, out_ref):
    f32 = jnp.float32
    bf16 = jnp.bfloat16

    x = xn_ref[:, :IN_DIM].astype(bf16)
    noise = xn_ref[:, IN_DIM:IN_DIM + ACTION_DIM]

    # fc1 -> relu (bf16 MXU operands, f32 accumulation)
    h = jnp.dot(x, w1_ref[...], preferred_element_type=f32) + b_ref[0:1, :]
    h = jnp.maximum(h, 0.0)
    # fc2 -> relu
    h = jnp.dot(h.astype(bf16), w23_ref[0],
                preferred_element_type=f32) + b_ref[1:2, :]
    h = jnp.maximum(h, 0.0)
    # fc3 -> relu
    h = jnp.dot(h.astype(bf16), w23_ref[1],
                preferred_element_type=f32) + b_ref[2:3, :]
    h = jnp.maximum(h, 0.0)

    # fused heads: one matmul produces [mean | log_std]
    heads = jnp.tanh(
        jnp.dot(h.astype(bf16), wh_ref[...], preferred_element_type=f32)
        + b_ref[3:4, :2 * ACTION_DIM])
    mean = heads[:, :ACTION_DIM]
    log_std = heads[:, ACTION_DIM:2 * ACTION_DIM]
    # NOTE: torch.clamp(tanh(x), -30, 30) is provably a no-op (tanh in [-1,1]),
    # so the clip is omitted; semantics are unchanged.

    # reparameterized sample: u = mean + exp(log_std) * eps
    u = mean + jnp.exp(log_std) * noise
    a = MAX_ACTION * jnp.tanh(u)

    # single lane-dense store: [a | max_action*mean | log_std | zeros]
    tb = a.shape[0]
    pad = jnp.zeros((tb, OUT_LANES - 3 * ACTION_DIM), f32)
    out_ref[...] = jnp.concatenate([a, MAX_ACTION * mean, log_std, pad], axis=1)


def sil_actor_forward(x, noise, params, num_tiles=None):
    """x: [B, IN_DIM] f32; noise: [B, ACTION_DIM] f32 (eps ~ N(0,1))."""
    B = x.shape[0]
    if num_tiles is None:
        num_tiles = _num_grid_tiles()

    # pack [x | noise] into one operand (fewer DMA descriptors)
    xn = jnp.concatenate([x, noise], axis=1)

    align = num_tiles * 8                       # sublane-legal tile per grid step
    pad = (-B) % align
    if pad:
        xn = jnp.pad(xn, ((0, pad), (0, 0)))
    bp = B + pad
    tb = bp // num_tiles

    out = pl.pallas_call(
        _actor_kernel,
        out_shape=jax.ShapeDtypeStruct((bp, OUT_LANES), jnp.float32),
        grid=(num_tiles,),
        in_specs=[
            # batch-tiled packed activations
            pl.BlockSpec((tb, XN_DIM), lambda i: (i, 0)),            # [x|noise]
            # weights: constant block index -> resident in VMEM across grid
            pl.BlockSpec((IN_DIM, HIDDEN), lambda i: (0, 0)),        # w1
            pl.BlockSpec((2, HIDDEN, HIDDEN), lambda i: (0, 0, 0)),  # w2|w3
            pl.BlockSpec((4, HIDDEN), lambda i: (0, 0)),             # b1|b2|b3|bh
            pl.BlockSpec((HIDDEN, 2 * ACTION_DIM), lambda i: (0, 0)),  # wm|ws
        ],
        out_specs=pl.BlockSpec((tb, OUT_LANES), lambda i: (i, 0)),
        compiler_params=pltpu.CompilerParams(
            dimension_semantics=("parallel",)),
    )(xn, params["w1"], params["w23"], params["b1234"], params["wh"])

    # single fused slice per returned tensor (no intermediate out[:B] copy)
    a = out[:B, 0:ACTION_DIM]
    mean = out[:B, ACTION_DIM:2 * ACTION_DIM]
    log_std = out[:B, 2 * ACTION_DIM:3 * ACTION_DIM]
    return a, mean, log_std


def init_params(key):
    """Deterministic synthetic parameters (PyTorch-Linear-like scaling),
    pre-packed / pre-cast the way the kernel wants them."""
    def linear(k, fan_in, fan_out):
        kw, kb = jax.random.split(k)
        bound = 1.0 / jnp.sqrt(fan_in)
        w = jax.random.uniform(kw, (fan_in, fan_out), jnp.float32, -bound, bound)
        b = jax.random.uniform(kb, (fan_out,), jnp.float32, -bound, bound)
        return w, b

    k1, k2, k3, k4, k5 = jax.random.split(key, 5)
    w1, b1 = linear(k1, IN_DIM, HIDDEN)
    w2, b2 = linear(k2, HIDDEN, HIDDEN)
    w3, b3 = linear(k3, HIDDEN, HIDDEN)
    wm, bm = linear(k4, HIDDEN, ACTION_DIM)
    ws, bs = linear(k5, HIDDEN, ACTION_DIM)

    # head bias padded to 256 lanes and folded into the bias stack
    bh = jnp.zeros((HIDDEN,), jnp.float32).at[:2 * ACTION_DIM].set(
        jnp.concatenate([bm, bs]))

    return dict(
        w1=w1.astype(jnp.bfloat16),                                  # [32, 256]
        w23=jnp.stack([w2, w3]).astype(jnp.bfloat16),                # [2, 256, 256]
        b1234=jnp.stack([b1, b2, b3, bh]),                           # [4, 256] f32
        wh=jnp.concatenate([wm, ws], axis=1).astype(jnp.bfloat16),   # [256, 8]
    )


def reference_forward(x, noise, params):
    """Pure-JAX reference with the SAME numerics (bf16 weights, f32 accum)."""
    bf16, f32 = jnp.bfloat16, jnp.float32
    w1, w23, b = params["w1"], params["w23"], params["b1234"]
    wh = params["wh"]
    bh = b[3:4, :2 * ACTION_DIM]

    h = jax.nn.relu(jnp.dot(x.astype(bf16), w1,
                            preferred_element_type=f32) + b[0:1, :])
    h = jax.nn.relu(jnp.dot(h.astype(bf16), w23[0],
                            preferred_element_type=f32) + b[1:2, :])
    h = jax.nn.relu(jnp.dot(h.astype(bf16), w23[1],
                            preferred_element_type=f32) + b[2:3, :])
    heads = jnp.tanh(jnp.dot(h.astype(bf16), wh,
                             preferred_element_type=f32) + bh)
    mean = heads[:, :ACTION_DIM]
    log_std = jnp.clip(heads[:, ACTION_DIM:], MIN_LOG_STD, MAX_LOG_STD)  # no-op
    u = mean + jnp.exp(log_std) * noise
    return MAX_ACTION * jnp.tanh(u), MAX_ACTION * mean, log_std


if __name__ == "__main__":
    key = jax.random.PRNGKey(0)
    k_params, k_x, k_noise = jax.random.split(key, 3)

    params = init_params(k_params)
    x = jax.random.normal(k_x, (BATCH, IN_DIM), jnp.float32)
    # torch.randn_like(mean) equivalent: standard-normal eps, generated as glue.
    noise = jax.random.normal(k_noise, (BATCH, ACTION_DIM), jnp.float32)

    a, mean, log_std = sil_actor_forward(x, noise, params)
    jax.block_until_ready((a, mean, log_std))

    a_ref, mean_ref, log_std_ref = reference_forward(x, noise, params)
    assert jnp.allclose(a, a_ref, atol=2e-3, rtol=1e-3), \
        float(jnp.max(jnp.abs(a - a_ref)))
    assert jnp.allclose(mean, mean_ref, atol=2e-3, rtol=1e-3), \
        float(jnp.max(jnp.abs(mean - mean_ref)))
    assert jnp.allclose(log_std, log_std_ref, atol=2e-3, rtol=1e-3), \
        float(jnp.max(jnp.abs(log_std - log_std_ref)))

    print("KERNEL_OK")
</pallas_src>

<mosaic_0001>
module attributes {stable_mosaic.version = 11 : i64} {
  func.func @_actor_kernel(%arg0: i32, %arg1: memref<128x36xf32, #tpu.memory_space<vmem>>, %arg2: memref<32x256xbf16, #tpu.memory_space<vmem>>, %arg3: memref<2x256x256xbf16, #tpu.memory_space<vmem>>, %arg4: memref<4x256xf32, #tpu.memory_space<vmem>>, %arg5: memref<256x8xbf16, #tpu.memory_space<vmem>>, %arg6: memref<128x128xf32, #tpu.memory_space<vmem>>) attributes {dimension_semantics = [#tpu.dimension_semantics<parallel>], iteration_bounds = array<i64: 1>, scalar_prefetch = 0 : i64, scratch_operands = 0 : i64, tpu.core_type = #tpu.core_type<tc>, window_params = [{transform_indices = @transform_0, window_bounds = array<i64: 128, 36>}, {pipeline_mode = #tpu.pipeline_mode<synchronous>, transform_indices = @transform_1, window_bounds = array<i64: 32, 256>}, {pipeline_mode = #tpu.pipeline_mode<synchronous>, transform_indices = @transform_2, window_bounds = array<i64: 2, 256, 256>}, {pipeline_mode = #tpu.pipeline_mode<synchronous>, transform_indices = @transform_3, window_bounds = array<i64: 4, 256>}, {pipeline_mode = #tpu.pipeline_mode<synchronous>, transform_indices = @transform_4, window_bounds = array<i64: 256, 8>}, {transform_indices = @transform_5, window_bounds = array<i64: 128, 128>}]} {
    %c0 = arith.constant 0 : index
    %c0_0 = arith.constant 0 : index
    %0 = vector.load %arg1[%c0, %c0_0] : memref<128x36xf32, #tpu.memory_space<vmem>>, vector<128x32xf32>
    %1 = arith.truncf %0 : vector<128x32xf32> to vector<128x32xbf16>
    %c0_1 = arith.constant 0 : index
    %c32 = arith.constant 32 : index
    %2 = vector.load %arg1[%c0_1, %c32] : memref<128x36xf32, #tpu.memory_space<vmem>>, vector<128x4xf32>
    %c0_2 = arith.constant 0 : index
    %c0_3 = arith.constant 0 : index
    %3 = vector.load %arg2[%c0_2, %c0_3] : memref<32x256xbf16, #tpu.memory_space<vmem>>, vector<32x256xbf16>
    %cst = arith.constant dense<0.000000e+00> : vector<128x256xf32>
    %4 = tpu.matmul %1, %3, %cst {dimension_numbers = #tpu.dot_dimension_numbers<[1], [0], [0], [1], [0, 0, 1, 1], [], []>} : vector<128x32xbf16>, vector<32x256xbf16>, vector<128x256xf32> -> vector<128x256xf32>
    %c0_4 = arith.constant 0 : index
    %c0_5 = arith.constant 0 : index
    %5 = vector.load %arg4[%c0_4, %c0_5] : memref<4x256xf32, #tpu.memory_space<vmem>>, vector<1x256xf32>
    %6 = vector.broadcast %5 : vector<1x256xf32> to vector<128x256xf32>
    %7 = arith.addf %4, %6 : vector<128x256xf32>
    %cst_6 = arith.constant 0.000000e+00 : f32
    %8 = vector.broadcast %cst_6 : f32 to vector<128x256xf32>
    %9 = arith.maximumf %7, %8 : vector<128x256xf32>
    %10 = arith.truncf %9 : vector<128x256xf32> to vector<128x256xbf16>
    %c0_7 = arith.constant 0 : index
    %c0_8 = arith.constant 0 : index
    %c0_9 = arith.constant 0 : index
    %11 = vector.load %arg3[%c0_7, %c0_8, %c0_9] : memref<2x256x256xbf16, #tpu.memory_space<vmem>>, vector<1x256x256xbf16>
    %12 = vector.shape_cast %11 : vector<1x256x256xbf16> to vector<256x256xbf16>
    %cst_10 = arith.constant dense<0.000000e+00> : vector<128x256xf32>
    %13 = tpu.matmul %10, %12, %cst_10 {dimension_numbers = #tpu.dot_dimension_numbers<[1], [0], [0], [1], [0, 0, 1, 1], [], []>} : vector<128x256xbf16>, vector<256x256xbf16>, vector<128x256xf32> -> vector<128x256xf32>
    %c1 = arith.constant 1 : index
    %c0_11 = arith.constant 0 : index
    %14 = vector.load %arg4[%c1, %c0_11] : memref<4x256xf32, #tpu.memory_space<vmem>>, vector<1x256xf32>
    %15 = vector.broadcast %14 : vector<1x256xf32> to vector<128x256xf32>
    %16 = arith.addf %13, %15 : vector<128x256xf32>
    %cst_12 = arith.constant 0.000000e+00 : f32
    %17 = vector.broadcast %cst_12 : f32 to vector<128x256xf32>
    %18 = arith.maximumf %16, %17 : vector<128x256xf32>
    %19 = arith.truncf %18 : vector<128x256xf32> to vector<128x256xbf16>
    %c1_13 = arith.constant 1 : index
    %c0_14 = arith.constant 0 : index
    %c0_15 = arith.constant 0 : index
    %20 = vector.load %arg3[%c1_13, %c0_14, %c0_15] : memref<2x256x256xbf16, #tpu.memory_space<vmem>>, vector<1x256x256xbf16>
    %21 = vector.shape_cast %20 : vector<1x256x256xbf16> to vector<256x256xbf16>
    %cst_16 = arith.constant dense<0.000000e+00> : vector<128x256xf32>
    %22 = tpu.matmul %19, %21, %cst_16 {dimension_numbers = #tpu.dot_dimension_numbers<[1], [0], [0], [1], [0, 0, 1, 1], [], []>} : vector<128x256xbf16>, vector<256x256xbf16>, vector<128x256xf32> -> vector<128x256xf32>
    %c2 = arith.constant 2 : index
    %c0_17 = arith.constant 0 : index
    %23 = vector.load %arg4[%c2, %c0_17] : memref<4x256xf32, #tpu.memory_space<vmem>>, vector<1x256xf32>
    %24 = vector.broadcast %23 : vector<1x256xf32> to vector<128x256xf32>
    %25 = arith.addf %22, %24 : vector<128x256xf32>
    %cst_18 = arith.constant 0.000000e+00 : f32
    %26 = vector.broadcast %cst_18 : f32 to vector<128x256xf32>
    %27 = arith.maximumf %25, %26 : vector<128x256xf32>
    %28 = arith.truncf %27 : vector<128x256xf32> to vector<128x256xbf16>
    %c0_19 = arith.constant 0 : index
    %c0_20 = arith.constant 0 : index
    %29 = vector.load %arg5[%c0_19, %c0_20] : memref<256x8xbf16, #tpu.memory_space<vmem>>, vector<256x8xbf16>
    %cst_21 = arith.constant dense<0.000000e+00> : vector<128x8xf32>
    %30 = tpu.matmul %28, %29, %cst_21 {dimension_numbers = #tpu.dot_dimension_numbers<[1], [0], [0], [1], [0, 0, 1, 1], [], []>} : vector<128x256xbf16>, vector<256x8xbf16>, vector<128x8xf32> -> vector<128x8xf32>
    %c3 = arith.constant 3 : index
    %c0_22 = arith.constant 0 : index
    %31 = vector.load %arg4[%c3, %c0_22] : memref<4x256xf32, #tpu.memory_space<vmem>>, vector<1x8xf32>
    %32 = vector.broadcast %31 : vector<1x8xf32> to vector<128x8xf32>
    %33 = arith.addf %30, %32 : vector<128x8xf32>
    %34 = math.tanh %33 : vector<128x8xf32>
    %35 = vector.extract_strided_slice %34 {offsets = [0, 0], sizes = [128, 4], strides = [1, 1]} : vector<128x8xf32> to vector<128x4xf32>
    %36 = vector.extract_strided_slice %34 {offsets = [0, 4], sizes = [128, 4], strides = [1, 1]} : vector<128x8xf32> to vector<128x4xf32>
    %37 = math.exp %36 : vector<128x4xf32>
    %38 = arith.mulf %37, %2 : vector<128x4xf32>
    %39 = arith.addf %35, %38 : vector<128x4xf32>
    %40 = math.tanh %39 : vector<128x4xf32>
    %cst_23 = arith.constant 2.000000e+00 : f32
    %41 = vector.broadcast %cst_23 : f32 to vector<128x4xf32>
    %42 = arith.mulf %41, %40 : vector<128x4xf32>
    %cst_24 = arith.constant 0.000000e+00 : f32
    %43 = vector.broadcast %cst_24 : f32 to vector<128x116xf32>
    %cst_25 = arith.constant 2.000000e+00 : f32
    %44 = vector.broadcast %cst_25 : f32 to vector<128x4xf32>
    %45 = arith.mulf %44, %35 : vector<128x4xf32>
    %46 = tpu.concatenate %42, %45, %36, %43 in 1 : vector<128x4xf32>, vector<128x4xf32>, vector<128x4xf32>, vector<128x116xf32> -> vector<128x128xf32>
    %c0_26 = arith.constant 0 : index
    %c0_27 = arith.constant 0 : index
    %47 = vector.load %arg6[%c0_26, %c0_27] : memref<128x128xf32, #tpu.memory_space<vmem>>, vector<128x128xf32>
    tpu.vector_store %arg6[%c0_26, %c0_27], %46 {strides = array<i32>} : memref<128x128xf32, #tpu.memory_space<vmem>>, vector<128x128xf32>,
    return
  }
  func.func @transform_0(%arg0: i32) -> (i32, i32) {
    %c0_i32 = arith.constant 0 : i32
    %c0_i32_0 = arith.constant 0 : i32
    return %arg0, %c0_i32 : i32, i32
  }
  func.func @transform_1(%arg0: i32) -> (i32, i32) {
    %c0_i32 = arith.constant 0 : i32
    %c0_i32_0 = arith.constant 0 : i32
    %c0_i32_1 = arith.constant 0 : i32
    return %c0_i32, %c0_i32_0 : i32, i32
  }
  func.func @transform_2(%arg0: i32) -> (i32, i32, i32) {
    %c0_i32 = arith.constant 0 : i32
    %c0_i32_0 = arith.constant 0 : i32
    %c0_i32_1 = arith.constant 0 : i32
    %c0_i32_2 = arith.constant 0 : i32
    return %c0_i32, %c0_i32_0, %c0_i32_1 : i32, i32, i32
  }
  func.func @transform_3(%arg0: i32) -> (i32, i32) {
    %c0_i32 = arith.constant 0 : i32
    %c0_i32_0 = arith.constant 0 : i32
    %c0_i32_1 = arith.constant 0 : i32
    return %c0_i32, %c0_i32_0 : i32, i32
  }
  func.func @transform_4(%arg0: i32) -> (i32, i32) {
    %c0_i32 = arith.constant 0 : i32
    %c0_i32_0 = arith.constant 0 : i32
    %c0_i32_1 = arith.constant 0 : i32
    return %c0_i32, %c0_i32_0 : i32, i32
  }
  func.func @transform_5(%arg0: i32) -> (i32, i32) {
    %c0_i32 = arith.constant 0 : i32
    %c0_i32_0 = arith.constant 0 : i32
    return %arg0, %c0_i32 : i32, i32
  }
}

</mosaic_0001>

<llo_original>
// kernel: tpu_custom_call.1
$region0: #{tpu_custom_call.1}
  #allocation0 [shape = 'u32[]', space=smem, size = 0x4, offset = 0x4, fixed_abs, tag = 'smem constant byte address 0x4 - core index']
  #allocation1 [shape = 'u32[144,128]{1,0:T(1,128)}', space=vmem, size = 0x12000, scoped, tag = 'internal scratch']
  %s0 = inlined_call_operand.vmem [shape: f32[128,36], index: 0, kind: input, shape index: {}]
  %s1 = inlined_call_operand.vmem [shape: bf16[32,256], index: 1, kind: input, shape index: {}]
  %s2 = inlined_call_operand.hbm [shape: bf16[2,256,256], index: 2, kind: input, shape index: {}]
  %s3 = inlined_call_operand.vmem [shape: f32[4,256], index: 3, kind: input, shape index: {}]
  %s4 = inlined_call_operand.vmem [shape: bf16[256,8], index: 4, kind: input, shape index: {}]
  %s5 = inlined_call_operand.hbm [shape: f32[128,128], index: 5, kind: output, shape index: {}]
  %s6 = sld [smem:[#allocation0]]
  $region34: #{tpu_custom_call.1} parent=0
    _
  %s8 = ssub.s32 1, %s6
  %s9 = scalar_select 0, %s8, %s6
  $region1: #{tpu_custom_call.1} parent=0
    #allocation2 [shape = 'u8[262144]{0}', space=vmem, size = 0x40000, scoped, tag = 'input window, operand 2, single buffered']
    #allocation3 [shape = 's32[1]{0}', space=sflag, size = 0x4, scoped, tag = 'scoped memory for tpu_custom_call.1']
    #allocation4 [shape = 's32[1]{0}', space=sflag, size = 0x4, scoped, tag = 'scoped memory for tpu_custom_call.1']
    #allocation5 [shape = 'u8[65536]{0}', space=vmem, size = 0x10000, scoped, tag = 'output window, operand 0, single buffered']
    %10 = vsyncpa [#allocation3], 0
    %11 = vsyncpa [#allocation4], 0
    // Predicated region
    $region2: #{tpu_custom_call.1} parent=1 // pred_check
      _
    $region3: #{tpu_custom_call.1} parent=1 // pred_check_branch
      %13 = sbr.rel (0) target = $region5
    $region4: #{tpu_custom_call.1} parent=1 // pred_region
      _
    $region5: #{tpu_custom_call.1} parent=1 // pred_fallthru
      _
    // Predicated region
    $region6: #{tpu_custom_call.1} parent=1 // pred_check
      _
    $region7: #{tpu_custom_call.1} parent=1 // pred_check_branch
      %15 = sbr.rel (0) target = $region9
    $region8: #{tpu_custom_call.1} parent=1 // pred_region
      _
    $region9: #{tpu_custom_call.1} parent=1 // pred_fallthru
      _
    // Predicated region
    $region10: #{tpu_custom_call.1} parent=1 // pred_check
      _
    $region11: #{tpu_custom_call.1} parent=1 // pred_check_branch
      %17 = sbr.rel (0) target = $region13
    $region12: #{tpu_custom_call.1} parent=1 // pred_region
      %s19 = ssub.s32 8192, 8192
      %20 = vsyncadd [#allocation3], %s19
      %s21 = sshll.u32 [#allocation2], 4
      %s22 = int_to_ptr.vmem [resolvable:$true] %s21
      %27 = dma.hbm_to_vmem [thread:$0]  %s2, 8192, %s22, [#allocation3], 128, 128, 8
    $region13: #{tpu_custom_call.1} parent=1 // pred_fallthru
      _
    // Predicated region
    $region14: #{tpu_custom_call.1} parent=1 // pred_check
      _
    $region15: #{tpu_custom_call.1} parent=1 // pred_check_branch
      %29 = sbr.rel (0) target = $region17
    $region16: #{tpu_custom_call.1} parent=1 // pred_region
      _
    $region17: #{tpu_custom_call.1} parent=1 // pred_fallthru
      _
    // Predicated region
    $region18: #{tpu_custom_call.1} parent=1 // pred_check
      _
    $region19: #{tpu_custom_call.1} parent=1 // pred_check_branch
      %31 = sbr.rel (0) target = $region21
    $region20: #{tpu_custom_call.1} parent=1 // pred_region
      _
    $region21: #{tpu_custom_call.1} parent=1 // pred_fallthru
      _
    // Predicated region
    $region22: #{tpu_custom_call.1} parent=1 // pred_check
      _
    $region23: #{tpu_custom_call.1} parent=1 // pred_check_branch
      %33 = sbr.rel (0) target = $region25
    $region24: #{tpu_custom_call.1} parent=1 // pred_region
      %34 = dma.done [#allocation3], 8192
    $region25: #{tpu_custom_call.1} parent=1 // pred_fallthru
      _
    %v36 = vld [vmem:[%s0] sm:$0xff]
    %v37 = vld [vmem:[%s0 + $0x8] sm:$0xff]
    %v38 = vld [vmem:[%s0 + $0x10] sm:$0xff]
    %v39 = vld [vmem:[%s0 + $0x18] sm:$0xff]
    %v40 = vld [vmem:[%s0 + $0x20] sm:$0xff]
    %v41 = vld [vmem:[%s0 + $0x28] sm:$0xff]
    %v42 = vld [vmem:[%s0 + $0x30] sm:$0xff]
    %v43 = vld [vmem:[%s0 + $0x38] sm:$0xff]
    %v44 = vld [vmem:[%s0 + $0x40] sm:$0xff]
    %v45 = vld [vmem:[%s0 + $0x48] sm:$0xff]
    %v46 = vld [vmem:[%s0 + $0x50] sm:$0xff]
    %v47 = vld [vmem:[%s0 + $0x58] sm:$0xff]
    %v48 = vld [vmem:[%s0 + $0x60] sm:$0xff]
    %v49 = vld [vmem:[%s0 + $0x68] sm:$0xff]
    %v50 = vld [vmem:[%s0 + $0x70] sm:$0xff]
    %v51 = vld [vmem:[%s0 + $0x78] sm:$0xff]
    %v52 = vpack.c.bf16 %v37, %v36
    %v53 = vpack.c.bf16 %v39, %v38
    %v54 = vpack.c.bf16 %v41, %v40
    %v55 = vpack.c.bf16 %v43, %v42
    %v56 = vpack.c.bf16 %v45, %v44
    %v57 = vpack.c.bf16 %v47, %v46
    %v58 = vpack.c.bf16 %v49, %v48
    %v59 = vpack.c.bf16 %v51, %v50
    %v60 = vld [vmem:[%s1] sm:$0xff]
    %v61 = vld [vmem:[%s1 + $0x8] sm:$0xff]
    %v62 = vld [vmem:[%s1 + $0x10] sm:$0xff]
    %v63 = vld [vmem:[%s1 + $0x18] sm:$0xff]
    %v64 = vld [vmem:[%s3] ss:$4 sm:$0x3]
    %v66 = vlaneseq
    %v67 = vshrl.u32 %v66, 7
    %v68 = vsub.s32 0, %v67
    %v69 = vrot.slane %v64, %v68
    %v70 = vlaneseq
    %v71 = vshrl.u32 %v70, 7
    %v72 = vsub.s32 1, %v71
    %v73 = vrot.slane %v64, %v72
    %v80 = vunpack.c.l.b16 %v60
    %v81 = vunpack.c.h.b16 %v60
    %v82 = vunpack.c.l.b16 %v61
    %v83 = vunpack.c.h.b16 %v61
    %v84 = vunpack.c.l.b16 %v62
    %v85 = vunpack.c.h.b16 %v62
    %v86 = vunpack.c.l.b16 %v63
    %v87 = vunpack.c.h.b16 %v63
    %v88 = vpack.c.b16 %v82, %v80
    %v89 = vpack.c.b16 %v83, %v81
    %v90 = vpack.c.b16 %v86, %v84
    %v91 = vpack.c.b16 %v87, %v85
    %vm96 = vcmask 261120
    %v98 = vsel %vm96, %v52, 0
    %v101 = vsel %vm96, %v53, 0
    %v104 = vsel %vm96, %v54, 0
    %v107 = vsel %vm96, %v55, 0
    %v110 = vsel %vm96, %v56, 0
    %v113 = vsel %vm96, %v57, 0
    %v116 = vsel %vm96, %v58, 0
    %v119 = vsel %vm96, %v59, 0
    %121 = vmatprep.subr.bf16.mxu0 %v89
    %122 = vmatpush1.bf16.msra.mxu0 %v88
    %123 = vmatprep.subr.bf16.mxu0 %v91
    %124 = vmatpush1.bf16.msra.mxu0 %v90
    %125 = vmatprep.subr.bf16.mxu0 0
    %126 = vmatpush1.bf16.msra.mxu0 0
    %127 = vmatprep.subr.bf16.mxu0 0
    %128 = vmatpush1.bf16.msra.mxu0 0
    %129 = vmatprep.subr.bf16.mxu0 0
    %130 = vmatpush1.bf16.msra.mxu0 0
    %131 = vmatprep.subr.bf16.mxu0 0
    %132 = vmatpush1.bf16.msra.mxu0 0
    %133 = vmatprep.subr.bf16.mxu0 0
    %134 = vmatpush1.bf16.msra.mxu0 0
    %135 = vmatprep.subr.bf16.mxu0 0
    %136 = vmatpush1.bf16.msra.mxu0 0
    %137 = vmatprep.subr.bf16.mxu0 0
    %138 = vmatpush1.bf16.msra.mxu0 0
    %139 = vmatprep.subr.bf16.mxu0 0
    %140 = vmatpush1.bf16.msra.mxu0 0
    %141 = vmatprep.subr.bf16.mxu0 0
    %142 = vmatpush1.bf16.msra.mxu0 0
    %143 = vmatprep.subr.bf16.mxu0 0
    %144 = vmatpush1.bf16.msra.mxu0 0
    %145 = vmatprep.subr.bf16.mxu0 0
    %146 = vmatpush1.bf16.msra.mxu0 0
    %147 = vmatprep.subr.bf16.mxu0 0
    %148 = vmatpush1.bf16.msra.mxu0 0
    %149 = vmatprep.subr.bf16.mxu0 0
    %150 = vmatpush1.bf16.msra.mxu0 0
    %151 = vmatprep.subr.bf16.mxu0 0
    %152 = vmatpush1.bf16.msra.mxu0 0
    %153 = vmatprep.mubr.bf16.mxu0 0
    %154 = vmatmul.mubr.bf16.gmra.mrb[0].mxu0 %v98
    %v155 = vpop.f32.mrb[0].mxu0
    %v156 = vadd.f32 %v69, %v155
    %v157 = vpop.f32.mrb[0].mxu0
    %v158 = vadd.f32 %v73, %v157
    %v159 = vpop.f32.mrb[0].mxu0
    %v160 = vadd.f32 %v69, %v159
    %v161 = vpop.f32.mrb[0].mxu0
    %v162 = vadd.f32 %v73, %v161
    %163 = vmatprep.mubr.bf16.mxu0 0
    %164 = vmatmul.mubr.bf16.gmra.mrb[0].mxu0 %v101
    %v165 = vpop.f32.mrb[0].mxu0
    %v166 = vadd.f32 %v69, %v165
    %v167 = vpop.f32.mrb[0].mxu0
    %v168 = vadd.f32 %v73, %v167
    %v169 = vpop.f32.mrb[0].mxu0
    %v170 = vadd.f32 %v69, %v169
    %v171 = vpop.f32.mrb[0].mxu0
    %v172 = vadd.f32 %v73, %v171
    %173 = vmatprep.mubr.bf16.mxu0 0
    %174 = vmatmul.mubr.bf16.gmra.mrb[0].mxu0 %v104
    %v175 = vpop.f32.mrb[0].mxu0
    %v176 = vadd.f32 %v69, %v175
    %v177 = vpop.f32.mrb[0].mxu0
    %v178 = vadd.f32 %v73, %v177
    %v179 = vpop.f32.mrb[0].mxu0
    %v180 = vadd.f32 %v69, %v179
    %v181 = vpop.f32.mrb[0].mxu0
    %v182 = vadd.f32 %v73, %v181
    %183 = vmatprep.mubr.bf16.mxu0 0
    %184 = vmatmul.mubr.bf16.gmra.mrb[0].mxu0 %v107
    %v185 = vpop.f32.mrb[0].mxu0
    %v186 = vadd.f32 %v69, %v185
    %v187 = vpop.f32.mrb[0].mxu0
    %v188 = vadd.f32 %v73, %v187
    %v189 = vpop.f32.mrb[0].mxu0
    %v190 = vadd.f32 %v69, %v189
    %v191 = vpop.f32.mrb[0].mxu0
    %v192 = vadd.f32 %v73, %v191
    %193 = vmatprep.mubr.bf16.mxu0 0
    %194 = vmatmul.mubr.bf16.gmra.mrb[0].mxu0 %v110
    %v195 = vpop.f32.mrb[0].mxu0
    %v196 = vadd.f32 %v69, %v195
    %v197 = vpop.f32.mrb[0].mxu0
    %v198 = vadd.f32 %v73, %v197
    %v199 = vpop.f32.mrb[0].mxu0
    %v200 = vadd.f32 %v69, %v199
    %v201 = vpop.f32.mrb[0].mxu0
    %v202 = vadd.f32 %v73, %v201
    %203 = vmatprep.mubr.bf16.mxu0 0
    %204 = vmatmul.mubr.bf16.gmra.mrb[0].mxu0 %v113
    %v205 = vpop.f32.mrb[0].mxu0
    %v206 = vadd.f32 %v69, %v205
    %v207 = vpop.f32.mrb[0].mxu0
    %v208 = vadd.f32 %v73, %v207
    %v209 = vpop.f32.mrb[0].mxu0
    %v210 = vadd.f32 %v69, %v209
    %v211 = vpop.f32.mrb[0].mxu0
    %v212 = vadd.f32 %v73, %v211
    %213 = vmatprep.mubr.bf16.mxu0 0
    %214 = vmatmul.mubr.bf16.gmra.mrb[0].mxu0 %v116
    %v215 = vpop.f32.mrb[0].mxu0
    %v216 = vadd.f32 %v69, %v215
    %v217 = vpop.f32.mrb[0].mxu0
    %v218 = vadd.f32 %v73, %v217
    %v219 = vpop.f32.mrb[0].mxu0
    %v220 = vadd.f32 %v69, %v219
    %v221 = vpop.f32.mrb[0].mxu0
    %v222 = vadd.f32 %v73, %v221
    %223 = vmatprep.mubr.bf16.mxu0 0
    %224 = vmatmul.mubr.bf16.gmra.mrb[0].mxu0 %v119
    %v225 = vpop.f32.mrb[0].mxu0
    %v226 = vadd.f32 %v69, %v225
    %v227 = vpop.f32.mrb[0].mxu0
    %v228 = vadd.f32 %v73, %v227
    %v229 = vpop.f32.mrb[0].mxu0
    %v230 = vadd.f32 %v69, %v229
    %v231 = vpop.f32.mrb[0].mxu0
    %v232 = vadd.f32 %v73, %v231
    %233 = vdwg.mxu0
    %v234 = vmax.f32 %v156, 0.0
    %v235 = vmax.f32 %v158, 0.0
    %v236 = vmax.f32 %v160, 0.0
    %v237 = vmax.f32 %v162, 0.0
    %v238 = vmax.f32 %v166, 0.0
    %v239 = vmax.f32 %v168, 0.0
    %v240 = vmax.f32 %v170, 0.0
    %v241 = vmax.f32 %v172, 0.0
    %v242 = vmax.f32 %v176, 0.0
    %v243 = vmax.f32 %v178, 0.0
    %v244 = vmax.f32 %v180, 0.0
    %v245 = vmax.f32 %v182, 0.0
    %v246 = vmax.f32 %v186, 0.0
    %v247 = vmax.f32 %v188, 0.0
    %v248 = vmax.f32 %v190, 0.0
    %v249 = vmax.f32 %v192, 0.0
    %v250 = vmax.f32 %v196, 0.0
    %v251 = vmax.f32 %v198, 0.0
    %v252 = vmax.f32 %v200, 0.0
    %v253 = vmax.f32 %v202, 0.0
    %v254 = vmax.f32 %v206, 0.0
    %v255 = vmax.f32 %v208, 0.0
    %v256 = vmax.f32 %v210, 0.0
    %v257 = vmax.f32 %v212, 0.0
    %v258 = vmax.f32 %v216, 0.0
    %v259 = vmax.f32 %v218, 0.0
    %v260 = vmax.f32 %v220, 0.0
    %v261 = vmax.f32 %v222, 0.0
    %v262 = vmax.f32 %v226, 0.0
    %v263 = vmax.f32 %v228, 0.0
    %v264 = vmax.f32 %v230, 0.0
    %v265 = vmax.f32 %v232, 0.0
    %v266 = vpack.c.bf16 %v236, %v234
    %v267 = vpack.c.bf16 %v237, %v235
    %v268 = vpack.c.bf16 %v240, %v238
    %v269 = vpack.c.bf16 %v241, %v239
    %v270 = vpack.c.bf16 %v244, %v242
    %v271 = vpack.c.bf16 %v245, %v243
    %v272 = vpack.c.bf16 %v248, %v246
    %v273 = vpack.c.bf16 %v249, %v247
    %v274 = vpack.c.bf16 %v252, %v250
    %v275 = vpack.c.bf16 %v253, %v251
    %v276 = vpack.c.bf16 %v256, %v254
    %v277 = vpack.c.bf16 %v257, %v255
    %v278 = vpack.c.bf16 %v260, %v258
    %v279 = vpack.c.bf16 %v261, %v259
    %v280 = vpack.c.bf16 %v264, %v262
    %v281 = vpack.c.bf16 %v265, %v263
    %v282 = vld [vmem:[#allocation2] sm:$0xff]
    %v283 = vld [vmem:[#allocation2 + $0x8] sm:$0xff]
    %v284 = vld [vmem:[#allocation2 + $0x10] sm:$0xff]
    %v285 = vld [vmem:[#allocation2 + $0x18] sm:$0xff]
    %v286 = vld [vmem:[#allocation2 + $0x20] sm:$0xff]
    %v287 = vld [vmem:[#allocation2 + $0x28] sm:$0xff]
    %v288 = vld [vmem:[#allocation2 + $0x30] sm:$0xff]
    %v289 = vld [vmem:[#allocation2 + $0x38] sm:$0xff]
    %v290 = vld [vmem:[#allocation2 + $0x40] sm:$0xff]
    %v291 = vld [vmem:[#allocation2 + $0x48] sm:$0xff]
    %v292 = vld [vmem:[#allocation2 + $0x50] sm:$0xff]
    %v293 = vld [vmem:[#allocation2 + $0x58] sm:$0xff]
    %v294 = vld [vmem:[#allocation2 + $0x60] sm:$0xff]
    %v295 = vld [vmem:[#allocation2 + $0x68] sm:$0xff]
    %v296 = vld [vmem:[#allocation2 + $0x70] sm:$0xff]
    %v297 = vld [vmem:[#allocation2 + $0x78] sm:$0xff]
    %v298 = vld [vmem:[#allocation2 + $0x80] sm:$0xff]
    %v299 = vld [vmem:[#allocation2 + $0x88] sm:$0xff]
    %v300 = vld [vmem:[#allocation2 + $0x90] sm:$0xff]
    %v301 = vld [vmem:[#allocation2 + $0x98] sm:$0xff]
    %v302 = vld [vmem:[#allocation2 + $0xa0] sm:$0xff]
    %v303 = vld [vmem:[#allocation2 + $0xa8] sm:$0xff]
    %v304 = vld [vmem:[#allocation2 + $0xb0] sm:$0xff]
    %v305 = vld [vmem:[#allocation2 + $0xb8] sm:$0xff]
    %v306 = vld [vmem:[#allocation2 + $0xc0] sm:$0xff]
    %v307 = vld [vmem:[#allocation2 + $0xc8] sm:$0xff]
    %v308 = vld [vmem:[#allocation2 + $0xd0] sm:$0xff]
    %v309 = vld [vmem:[#allocation2 + $0xd8] sm:$0xff]
    %v310 = vld [vmem:[#allocation2 + $0xe0] sm:$0xff]
    %v311 = vld [vmem:[#allocation2 + $0xe8] sm:$0xff]
    %v312 = vld [vmem:[#allocation2 + $0xf0] sm:$0xff]
    %v313 = vld [vmem:[#allocation2 + $0xf8] sm:$0xff]
    %s314 = scalar_lea.vmem %s3, 1
    %v315 = vld [vmem:[%s314] ss:$4 sm:$0x3]
    %v317 = vlaneseq
    %v318 = vshrl.u32 %v317, 7
    %v319 = vsub.s32 0, %v318
    %v320 = vrot.slane %v315, %v319
    %v321 = vlaneseq
    %v322 = vshrl.u32 %v321, 7
    %v323 = vsub.s32 1, %v322
    %v324 = vrot.slane %v315, %v323
    %v359 = vunpack.c.l.b16 %v282
    %v360 = vunpack.c.h.b16 %v282
    %v361 = vunpack.c.l.b16 %v283
    %v362 = vunpack.c.h.b16 %v283
    %v363 = vunpack.c.l.b16 %v284
    %v364 = vunpack.c.h.b16 %v284
    %v365 = vunpack.c.l.b16 %v285
    %v366 = vunpack.c.h.b16 %v285
    %v367 = vunpack.c.l.b16 %v286
    %v368 = vunpack.c.h.b16 %v286
    %v369 = vunpack.c.l.b16 %v287
    %v370 = vunpack.c.h.b16 %v287
    %v371 = vunpack.c.l.b16 %v288
    %v372 = vunpack.c.h.b16 %v288
    %v373 = vunpack.c.l.b16 %v289
    %v374 = vunpack.c.h.b16 %v289
    %v375 = vunpack.c.l.b16 %v290
    %v376 = vunpack.c.h.b16 %v290
    %v377 = vunpack.c.l.b16 %v291
    %v378 = vunpack.c.h.b16 %v291
    %v379 = vunpack.c.l.b16 %v292
    %v380 = vunpack.c.h.b16 %v292
    %v381 = vunpack.c.l.b16 %v293
    %v382 = vunpack.c.h.b16 %v293
    %v383 = vunpack.c.l.b16 %v294
    %v384 = vunpack.c.h.b16 %v294
    %v385 = vunpack.c.l.b16 %v295
    %v386 = vunpack.c.h.b16 %v295
    %v387 = vunpack.c.l.b16 %v296
    %v388 = vunpack.c.h.b16 %v296
    %v389 = vunpack.c.l.b16 %v297
    %v390 = vunpack.c.h.b16 %v297
    %v391 = vunpack.c.l.b16 %v298
    %v392 = vunpack.c.h.b16 %v298
    %v393 = vunpack.c.l.b16 %v299
    %v394 = vunpack.c.h.b16 %v299
    %v395 = vunpack.c.l.b16 %v300
    %v396 = vunpack.c.h.b16 %v300
    %v397 = vunpack.c.l.b16 %v301
    %v398 = vunpack.c.h.b16 %v301
    %v399 = vunpack.c.l.b16 %v302
    %v400 = vunpack.c.h.b16 %v302
    %v401 = vunpack.c.l.b16 %v303
    %v402 = vunpack.c.h.b16 %v303
    %v403 = vunpack.c.l.b16 %v304
    %v404 = vunpack.c.h.b16 %v304
    %v405 = vunpack.c.l.b16 %v305
    %v406 = vunpack.c.h.b16 %v305
    %v407 = vunpack.c.l.b16 %v306
    %v408 = vunpack.c.h.b16 %v306
    %v409 = vunpack.c.l.b16 %v307
    %v410 = vunpack.c.h.b16 %v307
    %v411 = vunpack.c.l.b16 %v308
    %v412 = vunpack.c.h.b16 %v308
    %v413 = vunpack.c.l.b16 %v309
    %v414 = vunpack.c.h.b16 %v309
    %v415 = vunpack.c.l.b16 %v310
    %v416 = vunpack.c.h.b16 %v310
    %v417 = vunpack.c.l.b16 %v311
    %v418 = vunpack.c.h.b16 %v311
    %v419 = vunpack.c.l.b16 %v312
    %v420 = vunpack.c.h.b16 %v312
    %v421 = vunpack.c.l.b16 %v313
    %v422 = vunpack.c.h.b16 %v313
    %v423 = vpack.c.b16 %v361, %v359
    %v424 = vpack.c.b16 %v362, %v360
    %v425 = vpack.c.b16 %v365, %v363
    %v426 = vpack.c.b16 %v366, %v364
    %v427 = vpack.c.b16 %v369, %v367
    %v428 = vpack.c.b16 %v370, %v368
    %v429 = vpack.c.b16 %v373, %v371
    %v430 = vpack.c.b16 %v374, %v372
    %v431 = vpack.c.b16 %v377, %v375
    %v432 = vpack.c.b16 %v378, %v376
    %v433 = vpack.c.b16 %v381, %v379
    %v434 = vpack.c.b16 %v382, %v380
    %v435 = vpack.c.b16 %v385, %v383
    %v436 = vpack.c.b16 %v386, %v384
    %v437 = vpack.c.b16 %v389, %v387
    %v438 = vpack.c.b16 %v390, %v388
    %v439 = vpack.c.b16 %v393, %v391
    %v440 = vpack.c.b16 %v394, %v392
    %v441 = vpack.c.b16 %v397, %v395
    %v442 = vpack.c.b16 %v398, %v396
    %v443 = vpack.c.b16 %v401, %v399
    %v444 = vpack.c.b16 %v402, %v400
    %v445 = vpack.c.b16 %v405, %v403
    %v446 = vpack.c.b16 %v406, %v404
    %v447 = vpack.c.b16 %v409, %v407
    %v448 = vpack.c.b16 %v410, %v408
    %v449 = vpack.c.b16 %v413, %v411
    %v450 = vpack.c.b16 %v414, %v412
    %v451 = vpack.c.b16 %v417, %v415
    %v452 = vpack.c.b16 %v418, %v416
    %v453 = vpack.c.b16 %v421, %v419
    %v454 = vpack.c.b16 %v422, %v420
    %487 = vmatprep.subr.bf16.mxu0 %v424
    %488 = vmatpush1.bf16.msra.mxu0 %v423
    %489 = vmatprep.subr.bf16.mxu0 %v426
    %490 = vmatpush1.bf16.msra.mxu0 %v425
    %491 = vmatprep.subr.bf16.mxu0 %v428
    %492 = vmatpush1.bf16.msra.mxu0 %v427
    %493 = vmatprep.subr.bf16.mxu0 %v430
    %494 = vmatpush1.bf16.msra.mxu0 %v429
    %495 = vmatprep.subr.bf16.mxu0 %v432
    %496 = vmatpush1.bf16.msra.mxu0 %v431
    %497 = vmatprep.subr.bf16.mxu0 %v434
    %498 = vmatpush1.bf16.msra.mxu0 %v433
    %499 = vmatprep.subr.bf16.mxu0 %v436
    %500 = vmatpush1.bf16.msra.mxu0 %v435
    %501 = vmatprep.subr.bf16.mxu0 %v438
    %502 = vmatpush1.bf16.msra.mxu0 %v437
    %503 = vmatprep.subr.bf16.mxu0 %v440
    %504 = vmatpush1.bf16.msra.mxu0 %v439
    %505 = vmatprep.subr.bf16.mxu0 %v442
    %506 = vmatpush1.bf16.msra.mxu0 %v441
    %507 = vmatprep.subr.bf16.mxu0 %v444
    %508 = vmatpush1.bf16.msra.mxu0 %v443
    %509 = vmatprep.subr.bf16.mxu0 %v446
    %510 = vmatpush1.bf16.msra.mxu0 %v445
    %511 = vmatprep.subr.bf16.mxu0 %v448
    %512 = vmatpush1.bf16.msra.mxu0 %v447
    %513 = vmatprep.subr.bf16.mxu0 %v450
    %514 = vmatpush1.bf16.msra.mxu0 %v449
    %515 = vmatprep.subr.bf16.mxu0 %v452
    %516 = vmatpush1.bf16.msra.mxu0 %v451
    %517 = vmatprep.subr.bf16.mxu0 %v454
    %518 = vmatpush1.bf16.msra.mxu0 %v453
    %519 = vmatprep.mubr.bf16.mxu0 %v267
    %520 = vmatmul.mubr.bf16.gmra.mrb[0].mxu0 %v266
    %v521 = vpop.f32.mrb[0].mxu0
    %v522 = vadd.f32 %v320, %v521
    %v523 = vpop.f32.mrb[0].mxu0
    %v524 = vadd.f32 %v324, %v523
    %v525 = vpop.f32.mrb[0].mxu0
    %v526 = vadd.f32 %v320, %v525
    %v527 = vpop.f32.mrb[0].mxu0
    %v528 = vadd.f32 %v324, %v527
    %529 = vmatprep.mubr.bf16.mxu0 %v269
    %530 = vmatmul.mubr.bf16.gmra.mrb[0].mxu0 %v268
    %v531 = vpop.f32.mrb[0].mxu0
    %v532 = vadd.f32 %v320, %v531
    %v533 = vpop.f32.mrb[0].mxu0
    %v534 = vadd.f32 %v324, %v533
    %v535 = vpop.f32.mrb[0].mxu0
    %v536 = vadd.f32 %v320, %v535
    %v537 = vpop.f32.mrb[0].mxu0
    %v538 = vadd.f32 %v324, %v537
    %539 = vmatprep.mubr.bf16.mxu0 %v271
    %540 = vmatmul.mubr.bf16.gmra.mrb[0].mxu0 %v270
    %v541 = vpop.f32.mrb[0].mxu0
    %v542 = vadd.f32 %v320, %v541
    %v543 = vpop.f32.mrb[0].mxu0
    %v544 = vadd.f32 %v324, %v543
    %v545 = vpop.f32.mrb[0].mxu0
    %v546 = vadd.f32 %v320, %v545
    %v547 = vpop.f32.mrb[0].mxu0
    %v548 = vadd.f32 %v324, %v547
    %549 = vmatprep.mubr.bf16.mxu0 %v273
    %550 = vmatmul.mubr.bf16.gmra.mrb[0].mxu0 %v272
    %v551 = vpop.f32.mrb[0].mxu0
    %v552 = vadd.f32 %v320, %v551
    %v553 = vpop.f32.mrb[0].mxu0
    %v554 = vadd.f32 %v324, %v553
    %v555 = vpop.f32.mrb[0].mxu0
    %v556 = vadd.f32 %v320, %v555
    %v557 = vpop.f32.mrb[0].mxu0
    %v558 = vadd.f32 %v324, %v557
    %559 = vmatprep.mubr.bf16.mxu0 %v275
    %560 = vmatmul.mubr.bf16.gmra.mrb[0].mxu0 %v274
    %v561 = vpop.f32.mrb[0].mxu0
    %v562 = vadd.f32 %v320, %v561
    %v563 = vpop.f32.mrb[0].mxu0
    %v564 = vadd.f32 %v324, %v563
    %v565 = vpop.f32.mrb[0].mxu0
    %v566 = vadd.f32 %v320, %v565
    %v567 = vpop.f32.mrb[0].mxu0
    %v568 = vadd.f32 %v324, %v567
    %569 = vmatprep.mubr.bf16.mxu0 %v277
    %570 = vmatmul.mubr.bf16.gmra.mrb[0].mxu0 %v276
    %v571 = vpop.f32.mrb[0].mxu0
    %v572 = vadd.f32 %v320, %v571
    %v573 = vpop.f32.mrb[0].mxu0
    %v574 = vadd.f32 %v324, %v573
    %v575 = vpop.f32.mrb[0].mxu0
    %v576 = vadd.f32 %v320, %v575
    %v577 = vpop.f32.mrb[0].mxu0
    %v578 = vadd.f32 %v324, %v577
    %579 = vmatprep.mubr.bf16.mxu0 %v279
    %580 = vmatmul.mubr.bf16.gmra.mrb[0].mxu0 %v278
    %v581 = vpop.f32.mrb[0].mxu0
    %v582 = vadd.f32 %v320, %v581
    %v583 = vpop.f32.mrb[0].mxu0
    %v584 = vadd.f32 %v324, %v583
    %v585 = vpop.f32.mrb[0].mxu0
    %v586 = vadd.f32 %v320, %v585
    %v587 = vpop.f32.mrb[0].mxu0
    %v588 = vadd.f32 %v324, %v587
    %589 = vmatprep.mubr.bf16.mxu0 %v281
    %590 = vmatmul.mubr.bf16.gmra.mrb[0].mxu0 %v280
    %v591 = vpop.f32.mrb[0].mxu0
    %v592 = vadd.f32 %v320, %v591
    %v593 = vpop.f32.mrb[0].mxu0
    %v594 = vadd.f32 %v324, %v593
    %v595 = vpop.f32.mrb[0].mxu0
    %v596 = vadd.f32 %v320, %v595
    %v597 = vpop.f32.mrb[0].mxu0
    %v598 = vadd.f32 %v324, %v597
    %599 = vdwg.mxu0
    %v600 = vmax.f32 %v522, 0.0
    %v601 = vmax.f32 %v524, 0.0
    %v602 = vmax.f32 %v526, 0.0
    %v603 = vmax.f32 %v528, 0.0
    %v604 = vmax.f32 %v532, 0.0
    %v605 = vmax.f32 %v534, 0.0
    %v606 = vmax.f32 %v536, 0.0
    %v607 = vmax.f32 %v538, 0.0
    %v608 = vmax.f32 %v542, 0.0
    %v609 = vmax.f32 %v544, 0.0
    %v610 = vmax.f32 %v546, 0.0
    %v611 = vmax.f32 %v548, 0.0
    %v612 = vmax.f32 %v552, 0.0
    %v613 = vmax.f32 %v554, 0.0
    %v614 = vmax.f32 %v556, 0.0
    %v615 = vmax.f32 %v558, 0.0
    %v616 = vmax.f32 %v562, 0.0
    %v617 = vmax.f32 %v564, 0.0
    %v618 = vmax.f32 %v566, 0.0
    %v619 = vmax.f32 %v568, 0.0
    %v620 = vmax.f32 %v572, 0.0
    %v621 = vmax.f32 %v574, 0.0
    %v622 = vmax.f32 %v576, 0.0
    %v623 = vmax.f32 %v578, 0.0
    %v624 = vmax.f32 %v582, 0.0
    %v625 = vmax.f32 %v584, 0.0
    %v626 = vmax.f32 %v586, 0.0
    %v627 = vmax.f32 %v588, 0.0
    %v628 = vmax.f32 %v592, 0.0
    %v629 = vmax.f32 %v594, 0.0
    %v630 = vmax.f32 %v596, 0.0
    %v631 = vmax.f32 %v598, 0.0
    %v632 = vpack.c.bf16 %v602, %v600
    %v633 = vpack.c.bf16 %v603, %v601
    %v634 = vpack.c.bf16 %v606, %v604
    %v635 = vpack.c.bf16 %v607, %v605
    %v636 = vpack.c.bf16 %v610, %v608
    %v637 = vpack.c.bf16 %v611, %v609
    %v638 = vpack.c.bf16 %v614, %v612
    %v639 = vpack.c.bf16 %v615, %v613
    %v640 = vpack.c.bf16 %v618, %v616
    %v641 = vpack.c.bf16 %v619, %v617
    %v642 = vpack.c.bf16 %v622, %v620
    %v643 = vpack.c.bf16 %v623, %v621
    %v644 = vpack.c.bf16 %v626, %v624
    %v645 = vpack.c.bf16 %v627, %v625
    %v646 = vpack.c.bf16 %v630, %v628
    %v647 = vpack.c.bf16 %v631, %v629
    %s648 = scalar_lea.vmem [#allocation2], 256
    %v649 = vld [vmem:[%s648] sm:$0xff]
    %v650 = vld [vmem:[%s648 + $0x8] sm:$0xff]
    %v651 = vld [vmem:[%s648 + $0x10] sm:$0xff]
    %v652 = vld [vmem:[%s648 + $0x18] sm:$0xff]
    %v653 = vld [vmem:[%s648 + $0x20] sm:$0xff]
    %v654 = vld [vmem:[%s648 + $0x28] sm:$0xff]
    %v655 = vld [vmem:[%s648 + $0x30] sm:$0xff]
    %v656 = vld [vmem:[%s648 + $0x38] sm:$0xff]
    %v657 = vld [vmem:[%s648 + $0x40] sm:$0xff]
    %v658 = vld [vmem:[%s648 + $0x48] sm:$0xff]
    %v659 = vld [vmem:[%s648 + $0x50] sm:$0xff]
    %v660 = vld [vmem:[%s648 + $0x58] sm:$0xff]
    %v661 = vld [vmem:[%s648 + $0x60] sm:$0xff]
    %v662 = vld [vmem:[%s648 + $0x68] sm:$0xff]
    %v663 = vld [vmem:[%s648 + $0x70] sm:$0xff]
    %v664 = vld [vmem:[%s648 + $0x78] sm:$0xff]
    %v665 = vld [vmem:[%s648 + $0x80] sm:$0xff]
    %v666 = vld [vmem:[%s648 + $0x88] sm:$0xff]
    %v667 = vld [vmem:[%s648 + $0x90] sm:$0xff]
    %v668 = vld [vmem:[%s648 + $0x98] sm:$0xff]
    %v669 = vld [vmem:[%s648 + $0xa0] sm:$0xff]
    %v670 = vld [vmem:[%s648 + $0xa8] sm:$0xff]
    %v671 = vld [vmem:[%s648 + $0xb0] sm:$0xff]
    %v672 = vld [vmem:[%s648 + $0xb8] sm:$0xff]
    %v673 = vld [vmem:[%s648 + $0xc0] sm:$0xff]
    %v674 = vld [vmem:[%s648 + $0xc8] sm:$0xff]
    %v675 = vld [vmem:[%s648 + $0xd0] sm:$0xff]
    %v676 = vld [vmem:[%s648 + $0xd8] sm:$0xff]
    %v677 = vld [vmem:[%s648 + $0xe0] sm:$0xff]
    %v678 = vld [vmem:[%s648 + $0xe8] sm:$0xff]
    %v679 = vld [vmem:[%s648 + $0xf0] sm:$0xff]
    %v680 = vld [vmem:[%s648 + $0xf8] sm:$0xff]
    %s681 = scalar_lea.vmem %s3, 2
    %v682 = vld [vmem:[%s681] ss:$4 sm:$0x3]
    %v684 = vlaneseq
    %v685 = vshrl.u32 %v684, 7
    %v686 = vsub.s32 0, %v685
    %v687 = vrot.slane %v682, %v686
    %v688 = vlaneseq
    %v689 = vshrl.u32 %v688, 7
    %v690 = vsub.s32 1, %v689
    %v691 = vrot.slane %v682, %v690
    %v726 = vunpack.c.l.b16 %v649
    %v727 = vunpack.c.h.b16 %v649
    %v728 = vunpack.c.l.b16 %v650
    %v729 = vunpack.c.h.b16 %v650
    %v730 = vunpack.c.l.b16 %v651
    %v731 = vunpack.c.h.b16 %v651
    %v732 = vunpack.c.l.b16 %v652
    %v733 = vunpack.c.h.b16 %v652
    %v734 = vunpack.c.l.b16 %v653
    %v735 = vunpack.c.h.b16 %v653
    %v736 = vunpack.c.l.b16 %v654
    %v737 = vunpack.c.h.b16 %v654
    %v738 = vunpack.c.l.b16 %v655
    %v739 = vunpack.c.h.b16 %v655
    %v740 = vunpack.c.l.b16 %v656
    %v741 = vunpack.c.h.b16 %v656
    %v742 = vunpack.c.l.b16 %v657
    %v743 = vunpack.c.h.b16 %v657
    %v744 = vunpack.c.l.b16 %v658
    %v745 = vunpack.c.h.b16 %v658
    %v746 = vunpack.c.l.b16 %v659
    %v747 = vunpack.c.h.b16 %v659
    %v748 = vunpack.c.l.b16 %v660
    %v749 = vunpack.c.h.b16 %v660
    %v750 = vunpack.c.l.b16 %v661
    %v751 = vunpack.c.h.b16 %v661
    %v752 = vunpack.c.l.b16 %v662
    %v753 = vunpack.c.h.b16 %v662
    %v754 = vunpack.c.l.b16 %v663
    %v755 = vunpack.c.h.b16 %v663
    %v756 = vunpack.c.l.b16 %v664
    %v757 = vunpack.c.h.b16 %v664
    %v758 = vunpack.c.l.b16 %v665
    %v759 = vunpack.c.h.b16 %v665
    %v760 = vunpack.c.l.b16 %v666
    %v761 = vunpack.c.h.b16 %v666
    %v762 = vunpack.c.l.b16 %v667
    %v763 = vunpack.c.h.b16 %v667
    %v764 = vunpack.c.l.b16 %v668
    %v765 = vunpack.c.h.b16 %v668
    %v766 = vunpack.c.l.b16 %v669
    %v767 = vunpack.c.h.b16 %v669
    %v768 = vunpack.c.l.b16 %v670
    %v769 = vunpack.c.h.b16 %v670
    %v770 = vunpack.c.l.b16 %v671
    %v771 = vunpack.c.h.b16 %v671
    %v772 = vunpack.c.l.b16 %v672
    %v773 = vunpack.c.h.b16 %v672
    %v774 = vunpack.c.l.b16 %v673
    %v775 = vunpack.c.h.b16 %v673
    %v776 = vunpack.c.l.b16 %v674
    %v777 = vunpack.c.h.b16 %v674
    %v778 = vunpack.c.l.b16 %v675
    %v779 = vunpack.c.h.b16 %v675
    %v780 = vunpack.c.l.b16 %v676
    %v781 = vunpack.c.h.b16 %v676
    %v782 = vunpack.c.l.b16 %v677
    %v783 = vunpack.c.h.b16 %v677
    %v784 = vunpack.c.l.b16 %v678
    %v785 = vunpack.c.h.b16 %v678
    %v786 = vunpack.c.l.b16 %v679
    %v787 = vunpack.c.h.b16 %v679
    %v788 = vunpack.c.l.b16 %v680
    %v789 = vunpack.c.h.b16 %v680
    %v790 = vpack.c.b16 %v728, %v726
    %v791 = vpack.c.b16 %v729, %v727
    %v792 = vpack.c.b16 %v732, %v730
    %v793 = vpack.c.b16 %v733, %v731
    %v794 = vpack.c.b16 %v736, %v734
    %v795 = vpack.c.b16 %v737, %v735
    %v796 = vpack.c.b16 %v740, %v738
    %v797 = vpack.c.b16 %v741, %v739
    %v798 = vpack.c.b16 %v744, %v742
    %v799 = vpack.c.b16 %v745, %v743
    %v800 = vpack.c.b16 %v748, %v746
    %v801 = vpack.c.b16 %v749, %v747
    %v802 = vpack.c.b16 %v752, %v750
    %v803 = vpack.c.b16 %v753, %v751
    %v804 = vpack.c.b16 %v756, %v754
    %v805 = vpack.c.b16 %v757, %v755
    %v806 = vpack.c.b16 %v760, %v758
    %v807 = vpack.c.b16 %v761, %v759
    %v808 = vpack.c.b16 %v764, %v762
    %v809 = vpack.c.b16 %v765, %v763
    %v810 = vpack.c.b16 %v768, %v766
    %v811 = vpack.c.b16 %v769, %v767
    %v812 = vpack.c.b16 %v772, %v770
    %v813 = vpack.c.b16 %v773, %v771
    %v814 = vpack.c.b16 %v776, %v774
    %v815 = vpack.c.b16 %v777, %v775
    %v816 = vpack.c.b16 %v780, %v778
    %v817 = vpack.c.b16 %v781, %v779
    %v818 = vpack.c.b16 %v784, %v782
    %v819 = vpack.c.b16 %v785, %v783
    %v820 = vpack.c.b16 %v788, %v786
    %v821 = vpack.c.b16 %v789, %v787
    %854 = vmatprep.subr.bf16.mxu0 %v791
    %855 = vmatpush1.bf16.msra.mxu0 %v790
    %856 = vmatprep.subr.bf16.mxu0 %v793
    %857 = vmatpush1.bf16.msra.mxu0 %v792
    %858 = vmatprep.subr.bf16.mxu0 %v795
    %859 = vmatpush1.bf16.msra.mxu0 %v794
    %860 = vmatprep.subr.bf16.mxu0 %v797
    %861 = vmatpush1.bf16.msra.mxu0 %v796
    %862 = vmatprep.subr.bf16.mxu0 %v799
    %863 = vmatpush1.bf16.msra.mxu0 %v798
    %864 = vmatprep.subr.bf16.mxu0 %v801
    %865 = vmatpush1.bf16.msra.mxu0 %v800
    %866 = vmatprep.subr.bf16.mxu0 %v803
    %867 = vmatpush1.bf16.msra.mxu0 %v802
    %868 = vmatprep.subr.bf16.mxu0 %v805
    %869 = vmatpush1.bf16.msra.mxu0 %v804
    %870 = vmatprep.subr.bf16.mxu0 %v807
    %871 = vmatpush1.bf16.msra.mxu0 %v806
    %872 = vmatprep.subr.bf16.mxu0 %v809
    %873 = vmatpush1.bf16.msra.mxu0 %v808
    %874 = vmatprep.subr.bf16.mxu0 %v811
    %875 = vmatpush1.bf16.msra.mxu0 %v810
    %876 = vmatprep.subr.bf16.mxu0 %v813
    %877 = vmatpush1.bf16.msra.mxu0 %v812
    %878 = vmatprep.subr.bf16.mxu0 %v815
    %879 = vmatpush1.bf16.msra.mxu0 %v814
    %880 = vmatprep.subr.bf16.mxu0 %v817
    %881 = vmatpush1.bf16.msra.mxu0 %v816
    %882 = vmatprep.subr.bf16.mxu0 %v819
    %883 = vmatpush1.bf16.msra.mxu0 %v818
    %884 = vmatprep.subr.bf16.mxu0 %v821
    %885 = vmatpush1.bf16.msra.mxu0 %v820
    %886 = vmatprep.mubr.bf16.mxu0 %v633
    %887 = vmatmul.mubr.bf16.gmra.mrb[0].mxu0 %v632
    %v888 = vpop.f32.mrb[0].mxu0
    %v889 = vadd.f32 %v687, %v888
    %v890 = vpop.f32.mrb[0].mxu0
    %v891 = vadd.f32 %v691, %v890
    %v892 = vpop.f32.mrb[0].mxu0
    %v893 = vadd.f32 %v687, %v892
    %v894 = vpop.f32.mrb[0].mxu0
    %v895 = vadd.f32 %v691, %v894
    %896 = vmatprep.mubr.bf16.mxu0 %v635
    %897 = vmatmul.mubr.bf16.gmra.mrb[0].mxu0 %v634
    %v898 = vpop.f32.mrb[0].mxu0
    %v899 = vadd.f32 %v687, %v898
    %v900 = vpop.f32.mrb[0].mxu0
    %v901 = vadd.f32 %v691, %v900
    %v902 = vpop.f32.mrb[0].mxu0
    %v903 = vadd.f32 %v687, %v902
    %v904 = vpop.f32.mrb[0].mxu0
    %v905 = vadd.f32 %v691, %v904
    %906 = vmatprep.mubr.bf16.mxu0 %v637
    %907 = vmatmul.mubr.bf16.gmra.mrb[0].mxu0 %v636
    %v908 = vpop.f32.mrb[0].mxu0
    %v909 = vadd.f32 %v687, %v908
    %v910 = vpop.f32.mrb[0].mxu0
    %v911 = vadd.f32 %v691, %v910
    %v912 = vpop.f32.mrb[0].mxu0
    %v913 = vadd.f32 %v687, %v912
    %v914 = vpop.f32.mrb[0].mxu0
    %v915 = vadd.f32 %v691, %v914
    %916 = vmatprep.mubr.bf16.mxu0 %v639
    %917 = vmatmul.mubr.bf16.gmra.mrb[0].mxu0 %v638
    %v918 = vpop.f32.mrb[0].mxu0
    %v919 = vadd.f32 %v687, %v918
    %v920 = vpop.f32.mrb[0].mxu0
    %v921 = vadd.f32 %v691, %v920
    %v922 = vpop.f32.mrb[0].mxu0
    %v923 = vadd.f32 %v687, %v922
    %v924 = vpop.f32.mrb[0].mxu0
    %v925 = vadd.f32 %v691, %v924
    %926 = vmatprep.mubr.bf16.mxu0 %v641
    %927 = vmatmul.mubr.bf16.gmra.mrb[0].mxu0 %v640
    %v928 = vpop.f32.mrb[0].mxu0
    %v929 = vadd.f32 %v687, %v928
    %v930 = vpop.f32.mrb[0].mxu0
    %v931 = vadd.f32 %v691, %v930
    %v932 = vpop.f32.mrb[0].mxu0
    %v933 = vadd.f32 %v687, %v932
    %v934 = vpop.f32.mrb[0].mxu0
    %v935 = vadd.f32 %v691, %v934
    %936 = vmatprep.mubr.bf16.mxu0 %v643
    %937 = vmatmul.mubr.bf16.gmra.mrb[0].mxu0 %v642
    %v938 = vpop.f32.mrb[0].mxu0
    %v939 = vadd.f32 %v687, %v938
    %v940 = vpop.f32.mrb[0].mxu0
    %v941 = vadd.f32 %v691, %v940
    %v942 = vpop.f32.mrb[0].mxu0
    %v943 = vadd.f32 %v687, %v942
    %v944 = vpop.f32.mrb[0].mxu0
    %v945 = vadd.f32 %v691, %v944
    %946 = vmatprep.mubr.bf16.mxu0 %v645
    %947 = vmatmul.mubr.bf16.gmra.mrb[0].mxu0 %v644
    %v948 = vpop.f32.mrb[0].mxu0
    %v949 = vadd.f32 %v687, %v948
    %v950 = vpop.f32.mrb[0].mxu0
    %v951 = vadd.f32 %v691, %v950
    %v952 = vpop.f32.mrb[0].mxu0
    %v953 = vadd.f32 %v687, %v952
    %v954 = vpop.f32.mrb[0].mxu0
    %v955 = vadd.f32 %v691, %v954
    %956 = vmatprep.mubr.bf16.mxu0 %v647
    %957 = vmatmul.mubr.bf16.gmra.mrb[0].mxu0 %v646
    %v958 = vpop.f32.mrb[0].mxu0
    %v959 = vadd.f32 %v687, %v958
    %v960 = vpop.f32.mrb[0].mxu0
    %v961 = vadd.f32 %v691, %v960
    %v962 = vpop.f32.mrb[0].mxu0
    %v963 = vadd.f32 %v687, %v962
    %v964 = vpop.f32.mrb[0].mxu0
    %v965 = vadd.f32 %v691, %v964
    %966 = vdwg.mxu0
    %v967 = vmax.f32 %v889, 0.0
    %v968 = vmax.f32 %v891, 0.0
    %v969 = vmax.f32 %v893, 0.0
    %v970 = vmax.f32 %v895, 0.0
    %v971 = vmax.f32 %v899, 0.0
    %v972 = vmax.f32 %v901, 0.0
    %v973 = vmax.f32 %v903, 0.0
    %v974 = vmax.f32 %v905, 0.0
    %v975 = vmax.f32 %v909, 0.0
    %v976 = vmax.f32 %v911, 0.0
    %v977 = vmax.f32 %v913, 0.0
    %v978 = vmax.f32 %v915, 0.0
    %v979 = vmax.f32 %v919, 0.0
    %v980 = vmax.f32 %v921, 0.0
    %v981 = vmax.f32 %v923, 0.0
    %v982 = vmax.f32 %v925, 0.0
    %v983 = vmax.f32 %v929, 0.0
    %v984 = vmax.f32 %v931, 0.0
    %v985 = vmax.f32 %v933, 0.0
    %v986 = vmax.f32 %v935, 0.0
    %v987 = vmax.f32 %v939, 0.0
    %v988 = vmax.f32 %v941, 0.0
    %v989 = vmax.f32 %v943, 0.0
    %v990 = vmax.f32 %v945, 0.0
    %v991 = vmax.f32 %v949, 0.0
    %v992 = vmax.f32 %v951, 0.0
    %v993 = vmax.f32 %v953, 0.0
    %v994 = vmax.f32 %v955, 0.0
    %v995 = vmax.f32 %v959, 0.0
    %v996 = vmax.f32 %v961, 0.0
    %v997 = vmax.f32 %v963, 0.0
    %v998 = vmax.f32 %v965, 0.0
    %v999 = vpack.c.bf16 %v969, %v967
    %v1000 = vpack.c.bf16 %v970, %v968
    %v1001 = vpack.c.bf16 %v973, %v971
    %v1002 = vpack.c.bf16 %v974, %v972
    %v1003 = vpack.c.bf16 %v977, %v975
    %v1004 = vpack.c.bf16 %v978, %v976
    %v1005 = vpack.c.bf16 %v981, %v979
    %v1006 = vpack.c.bf16 %v982, %v980
    %v1007 = vpack.c.bf16 %v985, %v983
    %v1008 = vpack.c.bf16 %v986, %v984
    %v1009 = vpack.c.bf16 %v989, %v987
    %v1010 = vpack.c.bf16 %v990, %v988
    %v1011 = vpack.c.bf16 %v993, %v991
    %v1012 = vpack.c.bf16 %v994, %v992
    %v1013 = vpack.c.bf16 %v997, %v995
    %v1014 = vpack.c.bf16 %v998, %v996
    %v1015 = vld [vmem:[%s4] sm:$0xf]
    %v1016 = vld [vmem:[%s4 + $0x4] sm:$0xf]
    %v1017 = vld [vmem:[%s4 + $0x8] sm:$0xf]
    %v1018 = vld [vmem:[%s4 + $0xc] sm:$0xf]
    %v1019 = vld [vmem:[%s4 + $0x10] sm:$0xf]
    %v1020 = vld [vmem:[%s4 + $0x14] sm:$0xf]
    %v1021 = vld [vmem:[%s4 + $0x18] sm:$0xf]
    %v1022 = vld [vmem:[%s4 + $0x1c] sm:$0xf]
    %v1023 = vld [vmem:[%s4 + $0x20] sm:$0xf]
    %v1024 = vld [vmem:[%s4 + $0x24] sm:$0xf]
    %v1025 = vld [vmem:[%s4 + $0x28] sm:$0xf]
    %v1026 = vld [vmem:[%s4 + $0x2c] sm:$0xf]
    %v1027 = vld [vmem:[%s4 + $0x30] sm:$0xf]
    %v1028 = vld [vmem:[%s4 + $0x34] sm:$0xf]
    %v1029 = vld [vmem:[%s4 + $0x38] sm:$0xf]
    %v1030 = vld [vmem:[%s4 + $0x3c] sm:$0xf]
    %v1031 = vld [vmem:[%s4 + $0x40] sm:$0xf]
    %v1032 = vld [vmem:[%s4 + $0x44] sm:$0xf]
    %v1033 = vld [vmem:[%s4 + $0x48] sm:$0xf]
    %v1034 = vld [vmem:[%s4 + $0x4c] sm:$0xf]
    %v1035 = vld [vmem:[%s4 + $0x50] sm:$0xf]
    %v1036 = vld [vmem:[%s4 + $0x54] sm:$0xf]
    %v1037 = vld [vmem:[%s4 + $0x58] sm:$0xf]
    %v1038 = vld [vmem:[%s4 + $0x5c] sm:$0xf]
    %v1039 = vld [vmem:[%s4 + $0x60] sm:$0xf]
    %v1040 = vld [vmem:[%s4 + $0x64] sm:$0xf]
    %v1041 = vld [vmem:[%s4 + $0x68] sm:$0xf]
    %v1042 = vld [vmem:[%s4 + $0x6c] sm:$0xf]
    %v1043 = vld [vmem:[%s4 + $0x70] sm:$0xf]
    %v1044 = vld [vmem:[%s4 + $0x74] sm:$0xf]
    %v1045 = vld [vmem:[%s4 + $0x78] sm:$0xf]
    %v1046 = vld [vmem:[%s4 + $0x7c] sm:$0xf]
    %v1047 = vld [vmem:[%s3 + $0x3] sm:$0x1]
    %v1048 = vlaneseq
    %v1049 = vshrl.u32 %v1048, 7
    %v1050 = vsub.s32 0, %v1049
    %v1051 = vrot.slane %v1047, %v1050
    %v1084 = vunpack.c.l.b16 %v1015
    %v1085 = vunpack.c.l.b16 %v1016
    %v1086 = vunpack.c.l.b16 %v1017
    %v1087 = vunpack.c.l.b16 %v1018
    %v1088 = vunpack.c.l.b16 %v1019
    %v1089 = vunpack.c.l.b16 %v1020
    %v1090 = vunpack.c.l.b16 %v1021
    %v1091 = vunpack.c.l.b16 %v1022
    %v1092 = vunpack.c.l.b16 %v1023
    %v1093 = vunpack.c.l.b16 %v1024
    %v1094 = vunpack.c.l.b16 %v1025
    %v1095 = vunpack.c.l.b16 %v1026
    %v1096 = vunpack.c.l.b16 %v1027
    %v1097 = vunpack.c.l.b16 %v1028
    %v1098 = vunpack.c.l.b16 %v1029
    %v1099 = vunpack.c.l.b16 %v1030
    %v1100 = vunpack.c.l.b16 %v1031
    %v1101 = vunpack.c.l.b16 %v1032
    %v1102 = vunpack.c.l.b16 %v1033
    %v1103 = vunpack.c.l.b16 %v1034
    %v1104 = vunpack.c.l.b16 %v1035
    %v1105 = vunpack.c.l.b16 %v1036
    %v1106 = vunpack.c.l.b16 %v1037
    %v1107 = vunpack.c.l.b16 %v1038
    %v1108 = vunpack.c.l.b16 %v1039
    %v1109 = vunpack.c.l.b16 %v1040
    %v1110 = vunpack.c.l.b16 %v1041
    %v1111 = vunpack.c.l.b16 %v1042
    %v1112 = vunpack.c.l.b16 %v1043
    %v1113 = vunpack.c.l.b16 %v1044
    %v1114 = vunpack.c.l.b16 %v1045
    %v1115 = vunpack.c.l.b16 %v1046
    %v1116 = vpack.c.b16 %v1085, %v1084
    %v1117 = vpack.c.b16 %v1087, %v1086
    %v1118 = vpack.c.b16 %v1089, %v1088
    %v1119 = vpack.c.b16 %v1091, %v1090
    %v1120 = vpack.c.b16 %v1093, %v1092
    %v1121 = vpack.c.b16 %v1095, %v1094
    %v1122 = vpack.c.b16 %v1097, %v1096
    %v1123 = vpack.c.b16 %v1099, %v1098
    %v1124 = vpack.c.b16 %v1101, %v1100
    %v1125 = vpack.c.b16 %v1103, %v1102
    %v1126 = vpack.c.b16 %v1105, %v1104
    %v1127 = vpack.c.b16 %v1107, %v1106
    %v1128 = vpack.c.b16 %v1109, %v1108
    %v1129 = vpack.c.b16 %v1111, %v1110
    %v1130 = vpack.c.b16 %v1113, %v1112
    %v1131 = vpack.c.b16 %v1115, %v1114
    %1148 = vmatprep.subr.bf16.mxu0 0
    %1149 = vmatpush1.bf16.msra.mxu0 %v1116
    %1150 = vmatprep.subr.bf16.mxu0 0
    %1151 = vmatpush1.bf16.msra.mxu0 %v1117
    %1152 = vmatprep.subr.bf16.mxu0 0
    %1153 = vmatpush1.bf16.msra.mxu0 %v1118
    %1154 = vmatprep.subr.bf16.mxu0 0
    %1155 = vmatpush1.bf16.msra.mxu0 %v1119
    %1156 = vmatprep.subr.bf16.mxu0 0
    %1157 = vmatpush1.bf16.msra.mxu0 %v1120
    %1158 = vmatprep.subr.bf16.mxu0 0
    %1159 = vmatpush1.bf16.msra.mxu0 %v1121
    %1160 = vmatprep.subr.bf16.mxu0 0
    %1161 = vmatpush1.bf16.msra.mxu0 %v1122
    %1162 = vmatprep.subr.bf16.mxu0 0
    %1163 = vmatpush1.bf16.msra.mxu0 %v1123
    %1164 = vmatprep.subr.bf16.mxu0 0
    %1165 = vmatpush1.bf16.msra.mxu0 %v1124
    %1166 = vmatprep.subr.bf16.mxu0 0
    %1167 = vmatpush1.bf16.msra.mxu0 %v1125
    %1168 = vmatprep.subr.bf16.mxu0 0
    %1169 = vmatpush1.bf16.msra.mxu0 %v1126
    %1170 = vmatprep.subr.bf16.mxu0 0
    %1171 = vmatpush1.bf16.msra.mxu0 %v1127
    %1172 = vmatprep.subr.bf16.mxu0 0
    %1173 = vmatpush1.bf16.msra.mxu0 %v1128
    %1174 = vmatprep.subr.bf16.mxu0 0
    %1175 = vmatpush1.bf16.msra.mxu0 %v1129
    %1176 = vmatprep.subr.bf16.mxu0 0
    %1177 = vmatpush1.bf16.msra.mxu0 %v1130
    %1178 = vmatprep.subr.bf16.mxu0 0
    %1179 = vmatpush1.bf16.msra.mxu0 %v1131
    %1180 = vmatprep.mubr.bf16.mxu0 %v1000
    %1181 = vmatmul.mubr.bf16.gmra.mrb[0].mxu0 %v999
    %v1182 = vpop.f32.mrb[0].mxu0
    %v1183 = vadd.f32 %v1051, %v1182
    %v1184 = vpop.f32.mrb[0].mxu0
    %v1185 = vpop.f32.mrb[0].mxu0
    %v1186 = vadd.f32 %v1051, %v1185
    %v1187 = vpop.f32.mrb[0].mxu0
    %1188 = vmatprep.mubr.bf16.mxu0 %v1002
    %1189 = vmatmul.mubr.bf16.gmra.mrb[0].mxu0 %v1001
    %v1190 = vpop.f32.mrb[0].mxu0
    %v1191 = vadd.f32 %v1051, %v1190
    %v1192 = vpop.f32.mrb[0].mxu0
    %v1193 = vpop.f32.mrb[0].mxu0
    %v1194 = vadd.f32 %v1051, %v1193
    %v1195 = vpop.f32.mrb[0].mxu0
    %1196 = vmatprep.mubr.bf16.mxu0 %v1004
    %1197 = vmatmul.mubr.bf16.gmra.mrb[0].mxu0 %v1003
    %v1198 = vpop.f32.mrb[0].mxu0
    %v1199 = vadd.f32 %v1051, %v1198
    %v1200 = vpop.f32.mrb[0].mxu0
    %v1201 = vpop.f32.mrb[0].mxu0
    %v1202 = vadd.f32 %v1051, %v1201
    %v1203 = vpop.f32.mrb[0].mxu0
    %1204 = vmatprep.mubr.bf16.mxu0 %v1006
    %1205 = vmatmul.mubr.bf16.gmra.mrb[0].mxu0 %v1005
    %v1206 = vpop.f32.mrb[0].mxu0
    %v1207 = vadd.f32 %v1051, %v1206
    %v1208 = vpop.f32.mrb[0].mxu0
    %v1209 = vpop.f32.mrb[0].mxu0
    %v1210 = vadd.f32 %v1051, %v1209
    %v1211 = vpop.f32.mrb[0].mxu0
    %1212 = vmatprep.mubr.bf16.mxu0 %v1008
    %1213 = vmatmul.mubr.bf16.gmra.mrb[0].mxu0 %v1007
    %v1214 = vpop.f32.mrb[0].mxu0
    %v1215 = vadd.f32 %v1051, %v1214
    %v1216 = vpop.f32.mrb[0].mxu0
    %v1217 = vpop.f32.mrb[0].mxu0
    %v1218 = vadd.f32 %v1051, %v1217
    %v1219 = vpop.f32.mrb[0].mxu0
    %1220 = vmatprep.mubr.bf16.mxu0 %v1010
    %1221 = vmatmul.mubr.bf16.gmra.mrb[0].mxu0 %v1009
    %v1222 = vpop.f32.mrb[0].mxu0
    %v1223 = vadd.f32 %v1051, %v1222
    %v1224 = vpop.f32.mrb[0].mxu0
    %v1225 = vpop.f32.mrb[0].mxu0
    %v1226 = vadd.f32 %v1051, %v1225
    %v1227 = vpop.f32.mrb[0].mxu0
    %1228 = vmatprep.mubr.bf16.mxu0 %v1012
    %1229 = vmatmul.mubr.bf16.gmra.mrb[0].mxu0 %v1011
    %v1230 = vpop.f32.mrb[0].mxu0
    %v1231 = vadd.f32 %v1051, %v1230
    %v1232 = vpop.f32.mrb[0].mxu0
    %v1233 = vpop.f32.mrb[0].mxu0
    %v1234 = vadd.f32 %v1051, %v1233
    %v1235 = vpop.f32.mrb[0].mxu0
    %1236 = vmatprep.mubr.bf16.mxu0 %v1014
    %1237 = vmatmul.mubr.bf16.gmra.mrb[0].mxu0 %v1013
    %v1238 = vpop.f32.mrb[0].mxu0
    %v1239 = vadd.f32 %v1051, %v1238
    %v1240 = vpop.f32.mrb[0].mxu0
    %v1241 = vpop.f32.mrb[0].mxu0
    %v1242 = vadd.f32 %v1051, %v1241
    %v1243 = vpop.f32.mrb[0].mxu0
    %1244 = vdwg.mxu0
    %v1245 = vtanh.pop %v1183
    %v1246 = vtanh.pop %v1186
    %v1247 = vtanh.pop %v1191
    %v1248 = vtanh.pop %v1194
    %v1249 = vtanh.pop %v1199
    %v1250 = vtanh.pop %v1202
    %v1251 = vtanh.pop %v1207
    %v1252 = vtanh.pop %v1210
    %v1253 = vtanh.pop %v1215
    %v1254 = vtanh.pop %v1218
    %v1255 = vtanh.pop %v1223
    %v1256 = vtanh.pop %v1226
    %v1257 = vtanh.pop %v1231
    %v1258 = vtanh.pop %v1234
    %v1259 = vtanh.pop %v1239
    %v1260 = vtanh.pop %v1242
    %v1261 = vmul.f32 %v1245, 1.442695
    %v1262 = vpow.pop %v1261
    %v1263 = vmul.f32 %v1246, 1.442695
    %v1264 = vpow.pop %v1263
    %v1265 = vmul.f32 %v1247, 1.442695
    %v1266 = vpow.pop %v1265
    %v1267 = vmul.f32 %v1248, 1.442695
    %v1268 = vpow.pop %v1267
    %v1269 = vmul.f32 %v1249, 1.442695
    %v1270 = vpow.pop %v1269
    %v1271 = vmul.f32 %v1250, 1.442695
    %v1272 = vpow.pop %v1271
    %v1273 = vmul.f32 %v1251, 1.442695
    %v1274 = vpow.pop %v1273
    %v1275 = vmul.f32 %v1252, 1.442695
    %v1276 = vpow.pop %v1275
    %v1277 = vmul.f32 %v1253, 1.442695
    %v1278 = vpow.pop %v1277
    %v1279 = vmul.f32 %v1254, 1.442695
    %v1280 = vpow.pop %v1279
    %v1281 = vmul.f32 %v1255, 1.442695
    %v1282 = vpow.pop %v1281
    %v1283 = vmul.f32 %v1256, 1.442695
    %v1284 = vpow.pop %v1283
    %v1285 = vmul.f32 %v1257, 1.442695
    %v1286 = vpow.pop %v1285
    %v1287 = vmul.f32 %v1258, 1.442695
    %v1288 = vpow.pop %v1287
    %v1289 = vmul.f32 %v1259, 1.442695
    %v1290 = vpow.pop %v1289
    %v1291 = vmul.f32 %v1260, 1.442695
    %v1292 = vpow.pop %v1291
    %1309 = vrot.lane.b32.xlu0 %v36, 100
    %v1310 = vpop.permute.xlu0 %1309
    %1311 = vrot.lane.b32.xlu0 %v37, 100
    %v1312 = vpop.permute.xlu0 %1311
    %1313 = vrot.lane.b32.xlu0 %v38, 100
    %v1314 = vpop.permute.xlu0 %1313
    %1315 = vrot.lane.b32.xlu0 %v39, 100
    %v1316 = vpop.permute.xlu0 %1315
    %1317 = vrot.lane.b32.xlu0 %v40, 100
    %v1318 = vpop.permute.xlu0 %1317
    %1319 = vrot.lane.b32.xlu0 %v41, 100
    %v1320 = vpop.permute.xlu0 %1319
    %1321 = vrot.lane.b32.xlu0 %v42, 100
    %v1322 = vpop.permute.xlu0 %1321
    %1323 = vrot.lane.b32.xlu0 %v43, 100
    %v1324 = vpop.permute.xlu0 %1323
    %1325 = vrot.lane.b32.xlu0 %v44, 100
    %v1326 = vpop.permute.xlu0 %1325
    %1327 = vrot.lane.b32.xlu0 %v45, 100
    %v1328 = vpop.permute.xlu0 %1327
    %1329 = vrot.lane.b32.xlu0 %v46, 100
    %v1330 = vpop.permute.xlu0 %1329
    %1331 = vrot.lane.b32.xlu0 %v47, 100
    %v1332 = vpop.permute.xlu0 %1331
    %1333 = vrot.lane.b32.xlu0 %v48, 100
    %v1334 = vpop.permute.xlu0 %1333
    %1335 = vrot.lane.b32.xlu0 %v49, 100
    %v1336 = vpop.permute.xlu0 %1335
    %1337 = vrot.lane.b32.xlu0 %v50, 100
    %v1338 = vpop.permute.xlu0 %1337
    %1339 = vrot.lane.b32.xlu0 %v51, 100
    %v1340 = vpop.permute.xlu0 %1339
    %v1357 = vmul.f32 %v1262, %v1310
    %v1358 = vmul.f32 %v1264, %v1312
    %v1359 = vmul.f32 %v1266, %v1314
    %v1360 = vmul.f32 %v1268, %v1316
    %v1361 = vmul.f32 %v1270, %v1318
    %v1362 = vmul.f32 %v1272, %v1320
    %v1363 = vmul.f32 %v1274, %v1322
    %v1364 = vmul.f32 %v1276, %v1324
    %v1365 = vmul.f32 %v1278, %v1326
    %v1366 = vmul.f32 %v1280, %v1328
    %v1367 = vmul.f32 %v1282, %v1330
    %v1368 = vmul.f32 %v1284, %v1332
    %v1369 = vmul.f32 %v1286, %v1334
    %v1370 = vmul.f32 %v1288, %v1336
    %v1371 = vmul.f32 %v1290, %v1338
    %v1372 = vmul.f32 %v1292, %v1340
    %1389 = vrot.lane.b32.xlu0 %v1357, 124
    %v1390 = vpop.permute.xlu0 %1389
    %1391 = vrot.lane.b32.xlu0 %v1358, 124
    %v1392 = vpop.permute.xlu0 %1391
    %1393 = vrot.lane.b32.xlu0 %v1359, 124
    %v1394 = vpop.permute.xlu0 %1393
    %1395 = vrot.lane.b32.xlu0 %v1360, 124
    %v1396 = vpop.permute.xlu0 %1395
    %1397 = vrot.lane.b32.xlu0 %v1361, 124
    %v1398 = vpop.permute.xlu0 %1397
    %1399 = vrot.lane.b32.xlu0 %v1362, 124
    %v1400 = vpop.permute.xlu0 %1399
    %1401 = vrot.lane.b32.xlu0 %v1363, 124
    %v1402 = vpop.permute.xlu0 %1401
    %1403 = vrot.lane.b32.xlu0 %v1364, 124
    %v1404 = vpop.permute.xlu0 %1403
    %1405 = vrot.lane.b32.xlu0 %v1365, 124
    %v1406 = vpop.permute.xlu0 %1405
    %1407 = vrot.lane.b32.xlu0 %v1366, 124
    %v1408 = vpop.permute.xlu0 %1407
    %1409 = vrot.lane.b32.xlu0 %v1367, 124
    %v1410 = vpop.permute.xlu0 %1409
    %1411 = vrot.lane.b32.xlu0 %v1368, 124
    %v1412 = vpop.permute.xlu0 %1411
    %1413 = vrot.lane.b32.xlu0 %v1369, 124
    %v1414 = vpop.permute.xlu0 %1413
    %1415 = vrot.lane.b32.xlu0 %v1370, 124
    %v1416 = vpop.permute.xlu0 %1415
    %1417 = vrot.lane.b32.xlu0 %v1371, 124
    %v1418 = vpop.permute.xlu0 %1417
    %1419 = vrot.lane.b32.xlu0 %v1372, 124
    %v1420 = vpop.permute.xlu0 %1419
    %v1437 = vadd.f32 %v1245, %v1390
    %v1438 = vadd.f32 %v1246, %v1392
    %v1439 = vadd.f32 %v1247, %v1394
    %v1440 = vadd.f32 %v1248, %v1396
    %v1441 = vadd.f32 %v1249, %v1398
    %v1442 = vadd.f32 %v1250, %v1400
    %v1443 = vadd.f32 %v1251, %v1402
    %v1444 = vadd.f32 %v1252, %v1404
    %v1445 = vadd.f32 %v1253, %v1406
    %v1446 = vadd.f32 %v1254, %v1408
    %v1447 = vadd.f32 %v1255, %v1410
    %v1448 = vadd.f32 %v1256, %v1412
    %v1449 = vadd.f32 %v1257, %v1414
    %v1450 = vadd.f32 %v1258, %v1416
    %v1451 = vadd.f32 %v1259, %v1418
    %v1452 = vadd.f32 %v1260, %v1420
    %v1453 = vtanh.pop %v1437
    %v1454 = vtanh.pop %v1438
    %v1455 = vtanh.pop %v1439
    %v1456 = vtanh.pop %v1440
    %v1457 = vtanh.pop %v1441
    %v1458 = vtanh.pop %v1442
    %v1459 = vtanh.pop %v1443
    %v1460 = vtanh.pop %v1444
    %v1461 = vtanh.pop %v1445
    %v1462 = vtanh.pop %v1446
    %v1463 = vtanh.pop %v1447
    %v1464 = vtanh.pop %v1448
    %v1465 = vtanh.pop %v1449
    %v1466 = vtanh.pop %v1450
    %v1467 = vtanh.pop %v1451
    %v1468 = vtanh.pop %v1452
    %v1469 = vmul.f32 %v1453, 2.0
    %v1470 = vmul.f32 %v1454, 2.0
    %v1471 = vmul.f32 %v1455, 2.0
    %v1472 = vmul.f32 %v1456, 2.0
    %v1473 = vmul.f32 %v1457, 2.0
    %v1474 = vmul.f32 %v1458, 2.0
    %v1475 = vmul.f32 %v1459, 2.0
    %v1476 = vmul.f32 %v1460, 2.0
    %v1477 = vmul.f32 %v1461, 2.0
    %v1478 = vmul.f32 %v1462, 2.0
    %v1479 = vmul.f32 %v1463, 2.0
    %v1480 = vmul.f32 %v1464, 2.0
    %v1481 = vmul.f32 %v1465, 2.0
    %v1482 = vmul.f32 %v1466, 2.0
    %v1483 = vmul.f32 %v1467, 2.0
    %v1484 = vmul.f32 %v1468, 2.0
    %v1485 = vmul.f32 %v1245, 2.0
    %v1486 = vmul.f32 %v1246, 2.0
    %v1487 = vmul.f32 %v1247, 2.0
    %v1488 = vmul.f32 %v1248, 2.0
    %v1489 = vmul.f32 %v1249, 2.0
    %v1490 = vmul.f32 %v1250, 2.0
    %v1491 = vmul.f32 %v1251, 2.0
    %v1492 = vmul.f32 %v1252, 2.0
    %v1493 = vmul.f32 %v1253, 2.0
    %v1494 = vmul.f32 %v1254, 2.0
    %v1495 = vmul.f32 %v1255, 2.0
    %v1496 = vmul.f32 %v1256, 2.0
    %v1497 = vmul.f32 %v1257, 2.0
    %v1498 = vmul.f32 %v1258, 2.0
    %v1499 = vmul.f32 %v1259, 2.0
    %v1500 = vmul.f32 %v1260, 2.0
    %1517 = vrot.lane.b32.xlu0 %v1485, 4
    %v1518 = vpop.permute.xlu0 %1517
    %1519 = vrot.lane.b32.xlu0 %v1486, 4
    %v1520 = vpop.permute.xlu0 %1519
    %1521 = vrot.lane.b32.xlu0 %v1487, 4
    %v1522 = vpop.permute.xlu0 %1521
    %1523 = vrot.lane.b32.xlu0 %v1488, 4
    %v1524 = vpop.permute.xlu0 %1523
    %1525 = vrot.lane.b32.xlu0 %v1489, 4
    %v1526 = vpop.permute.xlu0 %1525
    %1527 = vrot.lane.b32.xlu0 %v1490, 4
    %v1528 = vpop.permute.xlu0 %1527
    %1529 = vrot.lane.b32.xlu0 %v1491, 4
    %v1530 = vpop.permute.xlu0 %1529
    %1531 = vrot.lane.b32.xlu0 %v1492, 4
    %v1532 = vpop.permute.xlu0 %1531
    %1533 = vrot.lane.b32.xlu0 %v1493, 4
    %v1534 = vpop.permute.xlu0 %1533
    %1535 = vrot.lane.b32.xlu0 %v1494, 4
    %v1536 = vpop.permute.xlu0 %1535
    %1537 = vrot.lane.b32.xlu0 %v1495, 4
    %v1538 = vpop.permute.xlu0 %1537
    %1539 = vrot.lane.b32.xlu0 %v1496, 4
    %v1540 = vpop.permute.xlu0 %1539
    %1541 = vrot.lane.b32.xlu0 %v1497, 4
    %v1542 = vpop.permute.xlu0 %1541
    %1543 = vrot.lane.b32.xlu0 %v1498, 4
    %v1544 = vpop.permute.xlu0 %1543
    %1545 = vrot.lane.b32.xlu0 %v1499, 4
    %v1546 = vpop.permute.xlu0 %1545
    %1547 = vrot.lane.b32.xlu0 %v1500, 4
    %v1548 = vpop.permute.xlu0 %1547
    %1581 = vrot.lane.b32.xlu0 %v1245, 4
    %v1582 = vpop.permute.xlu0 %1581
    %1583 = vrot.lane.b32.xlu0 %v1246, 4
    %v1584 = vpop.permute.xlu0 %1583
    %1585 = vrot.lane.b32.xlu0 %v1247, 4
    %v1586 = vpop.permute.xlu0 %1585
    %1587 = vrot.lane.b32.xlu0 %v1248, 4
    %v1588 = vpop.permute.xlu0 %1587
    %1589 = vrot.lane.b32.xlu0 %v1249, 4
    %v1590 = vpop.permute.xlu0 %1589
    %1591 = vrot.lane.b32.xlu0 %v1250, 4
    %v1592 = vpop.permute.xlu0 %1591
    %1593 = vrot.lane.b32.xlu0 %v1251, 4
    %v1594 = vpop.permute.xlu0 %1593
    %1595 = vrot.lane.b32.xlu0 %v1252, 4
    %v1596 = vpop.permute.xlu0 %1595
    %1597 = vrot.lane.b32.xlu0 %v1253, 4
    %v1598 = vpop.permute.xlu0 %1597
    %1599 = vrot.lane.b32.xlu0 %v1254, 4
    %v1600 = vpop.permute.xlu0 %1599
    %1601 = vrot.lane.b32.xlu0 %v1255, 4
    %v1602 = vpop.permute.xlu0 %1601
    %1603 = vrot.lane.b32.xlu0 %v1256, 4
    %v1604 = vpop.permute.xlu0 %1603
    %1605 = vrot.lane.b32.xlu0 %v1257, 4
    %v1606 = vpop.permute.xlu0 %1605
    %1607 = vrot.lane.b32.xlu0 %v1258, 4
    %v1608 = vpop.permute.xlu0 %1607
    %1609 = vrot.lane.b32.xlu0 %v1259, 4
    %v1610 = vpop.permute.xlu0 %1609
    %1611 = vrot.lane.b32.xlu0 %v1260, 4
    %v1612 = vpop.permute.xlu0 %1611
    %vm1629 = vcmask 31744
    %v1630 = vsel %vm1629, %v1469, %v1518
    %v1631 = vsel %vm1629, %v1470, %v1520
    %v1632 = vsel %vm1629, %v1471, %v1522
    %v1633 = vsel %vm1629, %v1472, %v1524
    %v1634 = vsel %vm1629, %v1473, %v1526
    %v1635 = vsel %vm1629, %v1474, %v1528
    %v1636 = vsel %vm1629, %v1475, %v1530
    %v1637 = vsel %vm1629, %v1476, %v1532
    %v1638 = vsel %vm1629, %v1477, %v1534
    %v1639 = vsel %vm1629, %v1478, %v1536
    %v1640 = vsel %vm1629, %v1479, %v1538
    %v1641 = vsel %vm1629, %v1480, %v1540
    %v1642 = vsel %vm1629, %v1481, %v1542
    %v1643 = vsel %vm1629, %v1482, %v1544
    %v1644 = vsel %vm1629, %v1483, %v1546
    %v1645 = vsel %vm1629, %v1484, %v1548
    %vm1646 = vcmask 64512
    %v1647 = vsel %vm1646, %v1630, %v1582
    %v1648 = vsel %vm1646, %v1631, %v1584
    %v1649 = vsel %vm1646, %v1632, %v1586
    %v1650 = vsel %vm1646, %v1633, %v1588
    %v1651 = vsel %vm1646, %v1634, %v1590
    %v1652 = vsel %vm1646, %v1635, %v1592
    %v1653 = vsel %vm1646, %v1636, %v1594
    %v1654 = vsel %vm1646, %v1637, %v1596
    %v1655 = vsel %vm1646, %v1638, %v1598
    %v1656 = vsel %vm1646, %v1639, %v1600
    %v1657 = vsel %vm1646, %v1640, %v1602
    %v1658 = vsel %vm1646, %v1641, %v1604
    %v1659 = vsel %vm1646, %v1642, %v1606
    %v1660 = vsel %vm1646, %v1643, %v1608
    %v1661 = vsel %vm1646, %v1644, %v1610
    %v1662 = vsel %vm1646, %v1645, %v1612
    %vm1663 = vcmask 97280
    %v1664 = vsel %vm1663, %v1647, 0.0
    %v1665 = vsel %vm1663, %v1648, 0.0
    %v1666 = vsel %vm1663, %v1649, 0.0
    %v1667 = vsel %vm1663, %v1650, 0.0
    %v1668 = vsel %vm1663, %v1651, 0.0
    %v1669 = vsel %vm1663, %v1652, 0.0
    %v1670 = vsel %vm1663, %v1653, 0.0
    %v1671 = vsel %vm1663, %v1654, 0.0
    %v1672 = vsel %vm1663, %v1655, 0.0
    %v1673 = vsel %vm1663, %v1656, 0.0
    %v1674 = vsel %vm1663, %v1657, 0.0
    %v1675 = vsel %vm1663, %v1658, 0.0
    %v1676 = vsel %vm1663, %v1659, 0.0
    %v1677 = vsel %vm1663, %v1660, 0.0
    %v1678 = vsel %vm1663, %v1661, 0.0
    %v1679 = vsel %vm1663, %v1662, 0.0
    %1680 = vst [vmem:[#allocation5] sm:$0xff] %v1664
    %1681 = vst [vmem:[#allocation5 + $0x8] sm:$0xff] %v1665
    %1682 = vst [vmem:[#allocation5 + $0x10] sm:$0xff] %v1666
    %1683 = vst [vmem:[#allocation5 + $0x18] sm:$0xff] %v1667
    %1684 = vst [vmem:[#allocation5 + $0x20] sm:$0xff] %v1668
    %1685 = vst [vmem:[#allocation5 + $0x28] sm:$0xff] %v1669
    %1686 = vst [vmem:[#allocation5 + $0x30] sm:$0xff] %v1670
    %1687 = vst [vmem:[#allocation5 + $0x38] sm:$0xff] %v1671
    %1688 = vst [vmem:[#allocation5 + $0x40] sm:$0xff] %v1672
    %1689 = vst [vmem:[#allocation5 + $0x48] sm:$0xff] %v1673
    %1690 = vst [vmem:[#allocation5 + $0x50] sm:$0xff] %v1674
    %1691 = vst [vmem:[#allocation5 + $0x58] sm:$0xff] %v1675
    %1692 = vst [vmem:[#allocation5 + $0x60] sm:$0xff] %v1676
    %1693 = vst [vmem:[#allocation5 + $0x68] sm:$0xff] %v1677
    %1694 = vst [vmem:[#allocation5 + $0x70] sm:$0xff] %v1678
    %1695 = vst [vmem:[#allocation5 + $0x78] sm:$0xff] %v1679
    // Predicated region
    $region26: #{tpu_custom_call.1} parent=1 // pred_check
      _
    $region27: #{tpu_custom_call.1} parent=1 // pred_check_branch
      %1697 = sbr.rel (0) target = $region29
    $region28: #{tpu_custom_call.1} parent=1 // pred_region
      %s1699 = ssub.s32 2048, 2048
      %1700 = vsyncadd [#allocation4], %s1699
      %s1701 = sshll.u32 [#allocation5], 4
      %s1702 = int_to_ptr.vmem [resolvable:$true] %s1701
      %1707 = dma.vmem_to_hbm [thread:$0]  %s1702, 2048, %s5, [#allocation4], 128, 128, 8
    $region29: #{tpu_custom_call.1} parent=1 // pred_fallthru
      _
    // Predicated region
    $region30: #{tpu_custom_call.1} parent=1 // pred_check
      _
    $region31: #{tpu_custom_call.1} parent=1 // pred_check_branch
      %1709 = sbr.rel (0) target = $region33
    $region32: #{tpu_custom_call.1} parent=1 // pred_region
      %1710 = dma.done [#allocation4], 2048
    $region33: #{tpu_custom_call.1} parent=1 // pred_fallthru
      _
    %1711 = vsyncpa [#allocation3], 1
    %1712 = vsyncpa [#allocation4], 1

</llo_original>
